<compile_context>
chip_gen: v6e
topology: v6e:2x2x1
jax: 0.10.0
libtpu: 0.0.40
codegen_flags: <defaults>
</compile_context>

<pallas_src>
import jax
import jax.numpy as jnp
import numpy as np
from jax.experimental import pallas as pl
from jax.experimental.pallas import tpu as pltpu

# logical sizes
FIN, HID, OUT = 4, 200, 1
# padded (lane friendly) hidden size
H_P = 256


# ----------------------------- Pallas kernel ------------------------------
def critic_mlp_kernel(x_ref, w1_ref, b1_ref, w2_ref, b2_ref,
                      w3_ref, b3_ref, w4_ref, b4_ref, out_ref):
    # x: (tile_b, 4) bf16; w1/w2/w3 bf16 (VMEM-resident); biases/w4 f32.
    x = x_ref[...]

    h1 = jnp.dot(x, w1_ref[...], preferred_element_type=jnp.float32)
    h1 = jnp.maximum(h1 + b1_ref[...], 0.0)                    # (tile_b, H_P) f32

    h2 = jnp.dot(h1.astype(jnp.bfloat16), w2_ref[...],
                 preferred_element_type=jnp.float32)
    h2 = jnp.maximum(h2 + b2_ref[...], 0.0)

    h3 = jnp.dot(h2.astype(jnp.bfloat16), w3_ref[...],
                 preferred_element_type=jnp.float32)
    h3 = jnp.maximum(h3 + b3_ref[...], 0.0)

    # Final 200 -> 1 layer: elementwise multiply (VPU) + lane reduce (XLU)
    # against an f32 weight row -- avoids a 256x128 padded MXU matmul.
    # Store ONLY the single real column (no broadcast slab).
    out_ref[...] = (jnp.sum(h3 * w4_ref[...], axis=-1, keepdims=True)
                    + b4_ref[...])                             # (tile_b, 1)


def critic_forward_pallas(x_pad, p, tile_b):
    """x_pad: (B_pad, 4) bf16 with B_pad % tile_b == 0; p: prepared params."""
    b_pad = x_pad.shape[0]
    grid = (b_pad // tile_b,)

    const = lambda i: (0, 0)        # weights/biases: same block every grid step
    in_specs = [
        pl.BlockSpec((tile_b, FIN), lambda i: (i, 0)),         # x (batch-tiled)
        pl.BlockSpec((FIN, H_P), const),                       # w1 (4, 256)
        pl.BlockSpec((1, H_P), const),                         # b1
        pl.BlockSpec((H_P, H_P), const),                       # w2
        pl.BlockSpec((1, H_P), const),                         # b2
        pl.BlockSpec((H_P, H_P), const),                       # w3
        pl.BlockSpec((1, H_P), const),                         # b3
        pl.BlockSpec((1, H_P), const),                         # w4 (row vector)
        pl.BlockSpec((1, 1), const),                           # b4
    ]
    out_specs = pl.BlockSpec((tile_b, 1), lambda i: (i, 0))    # single real col

    # Advisory cost hint for XLA's scheduler around the custom call.
    flops = 2 * b_pad * (FIN * H_P + H_P * H_P + H_P * H_P + H_P)
    bytes_accessed = (b_pad * FIN * 2                          # x (bf16)
                      + b_pad * 4                              # out (f32)
                      + (FIN * H_P + 2 * H_P * H_P) * 2        # bf16 weights
                      + (4 * H_P + 1) * 4)                     # f32 biases + w4
    cost = pl.CostEstimate(flops=flops, transcendentals=0,
                           bytes_accessed=bytes_accessed)

    return pl.pallas_call(
        critic_mlp_kernel,
        out_shape=jax.ShapeDtypeStruct((b_pad, OUT), jnp.float32),
        grid=grid,
        in_specs=in_specs,
        out_specs=out_specs,
        compiler_params=pltpu.CompilerParams(
            dimension_semantics=("parallel",)),
        cost_estimate=cost,
    )(x_pad, p["w1"], p["b1"], p["w2"], p["b2"],
      p["w3"], p["b3"], p["w4"], p["b4"])


# --------------------------- parameter setup ------------------------------
def kaiming_uniform(key, fan_in, fan_out):
    # PyTorch kaiming_uniform_(mode='fan_in', nonlinearity='relu'):
    # bound = sqrt(2) * sqrt(3 / fan_in) = sqrt(6 / fan_in)
    bound = float(np.sqrt(6.0 / fan_in))
    # stored as (in_features, out_features) so forward is x @ W
    return jax.random.uniform(key, (fan_in, fan_out), jnp.float32,
                              minval=-bound, maxval=bound)


def make_params(key):
    k1, k2, k3, k4 = jax.random.split(key, 4)
    return {
        "w1": kaiming_uniform(k1, FIN, HID), "b1": jnp.zeros((HID,), jnp.float32),
        "w2": kaiming_uniform(k2, HID, HID), "b2": jnp.zeros((HID,), jnp.float32),
        "w3": kaiming_uniform(k3, HID, HID), "b3": jnp.zeros((HID,), jnp.float32),
        "w4": kaiming_uniform(k4, HID, OUT), "b4": jnp.zeros((OUT,), jnp.float32),
    }


def _pad2(a, rows, cols, dtype):
    out = jnp.zeros((rows, cols), dtype)
    return out.at[:a.shape[0], :a.shape[1]].set(a.astype(dtype))


def prepare_params(params):
    """Pad + cast the weights ONCE; the returned dict is cached and reused by
    every forward call (no per-call padding / layout work)."""
    return {
        "w1": _pad2(params["w1"], FIN, H_P, jnp.bfloat16),      # (4, 256)
        "b1": _pad2(params["b1"][None, :], 1, H_P, jnp.float32),
        "w2": _pad2(params["w2"], H_P, H_P, jnp.bfloat16),
        "b2": _pad2(params["b2"][None, :], 1, H_P, jnp.float32),
        "w3": _pad2(params["w3"], H_P, H_P, jnp.bfloat16),
        "b3": _pad2(params["b3"][None, :], 1, H_P, jnp.float32),
        # final layer kept f32 as a single row (in-kernel VPU mul + XLU reduce)
        "w4": _pad2(params["w4"].T, 1, H_P, jnp.float32),
        "b4": params["b4"].reshape(1, 1).astype(jnp.float32),
    }


# ------------------------------ forward -----------------------------------
def _choose_tile_b(B):
    # Large batches: big 256-multiple tiles (v6e/v7x MXU is 256 wide) to
    # amortize the ~0.35 us per-grid-step overhead, while keeping >= 2 grid
    # steps so v7x's two TensorCores both get work on the "parallel" axis.
    if B >= 1024:
        return 512
    if B >= 512:
        return 256
    if B >= 256:
        return 128          # B=256 -> 2 x 128 (keeps 2 steps for v7x)
    # Small batch: one tile, rounded up to a multiple of 16 (bf16 sublane tile).
    return max(16, -(-B // 16) * 16)


def residual_critic_forward(state, action, prepared):
    """state: (B, 2), action: (B, 2) -> (B, 1) value estimate."""
    x = jnp.concatenate([state, action], axis=1).astype(jnp.bfloat16)   # (B, 4)
    B = x.shape[0]
    tile_b = _choose_tile_b(B)
    b_pad = -(-B // tile_b) * tile_b
    if b_pad != B:                       # pad the batch dim only when needed
        x = jnp.pad(x, ((0, b_pad - B), (0, 0)))
    out = critic_forward_pallas(x, prepared, tile_b)          # (B_pad, 1) f32
    return out[:B] if b_pad != B else out                     # (B, 1)


# ---------------------------- reference (JAX) ------------------------------
def reference_forward(state, action, params):
    # Pure-JAX reference using the same bf16-operand / f32-accumulate recipe
    # as the kernel (weights quantized to bf16, biases and final layer f32).
    x = jnp.concatenate([state, action], axis=1)

    def lin(h, w, b):
        return jnp.dot(h.astype(jnp.bfloat16), w.astype(jnp.bfloat16),
                       preferred_element_type=jnp.float32) + b

    h = jnp.maximum(lin(x, params["w1"], params["b1"]), 0.0)
    h = jnp.maximum(lin(h, params["w2"], params["b2"]), 0.0)
    h = jnp.maximum(lin(h, params["w3"], params["b3"]), 0.0)
    return jnp.dot(h, params["w4"]) + params["b4"]             # final layer f32


if __name__ == "__main__":
    key = jax.random.PRNGKey(0)
    kp, ks, ka = jax.random.split(key, 3)

    params = make_params(kp)
    prepared = prepare_params(params)        # padded/cast once, reused per call

    B = 256                                  # two 128-row batch tiles
    state = jax.random.normal(ks, (B, 2), jnp.float32)
    action = jax.random.normal(ka, (B, 2), jnp.float32)

    fwd = jax.jit(residual_critic_forward)
    out = jax.block_until_ready(fwd(state, action, prepared))
    assert out.shape == (B, OUT)

    ref = reference_forward(state, action, params)
    np.testing.assert_allclose(np.asarray(out), np.asarray(ref),
                               rtol=1e-3, atol=1e-3)
    print("KERNEL_OK")
</pallas_src>

<mosaic_0001>
module attributes {stable_mosaic.version = 11 : i64} {
  func.func @critic_mlp_kernel(%arg0: i32, %arg1: memref<128x4xbf16, #tpu.memory_space<vmem>>, %arg2: memref<4x256xbf16, #tpu.memory_space<vmem>>, %arg3: memref<1x256xf32, #tpu.memory_space<vmem>>, %arg4: memref<256x256xbf16, #tpu.memory_space<vmem>>, %arg5: memref<1x256xf32, #tpu.memory_space<vmem>>, %arg6: memref<256x256xbf16, #tpu.memory_space<vmem>>, %arg7: memref<1x256xf32, #tpu.memory_space<vmem>>, %arg8: memref<1x256xf32, #tpu.memory_space<vmem>>, %arg9: memref<1x1xf32, #tpu.memory_space<vmem>>, %arg10: memref<128x1xf32, #tpu.memory_space<vmem>>) attributes {dimension_semantics = [#tpu.dimension_semantics<parallel>], iteration_bounds = array<i64: 2>, scalar_prefetch = 0 : i64, scratch_operands = 0 : i64, tpu.core_type = #tpu.core_type<tc>, window_params = [{transform_indices = @transform_0, window_bounds = array<i64: 128, 4>}, {pipeline_mode = #tpu.pipeline_mode<synchronous>, transform_indices = @transform_1, window_bounds = array<i64: 4, 256>}, {pipeline_mode = #tpu.pipeline_mode<synchronous>, transform_indices = @transform_2, window_bounds = array<i64: 1, 256>}, {pipeline_mode = #tpu.pipeline_mode<synchronous>, transform_indices = @transform_3, window_bounds = array<i64: 256, 256>}, {pipeline_mode = #tpu.pipeline_mode<synchronous>, transform_indices = @transform_4, window_bounds = array<i64: 1, 256>}, {pipeline_mode = #tpu.pipeline_mode<synchronous>, transform_indices = @transform_5, window_bounds = array<i64: 256, 256>}, {pipeline_mode = #tpu.pipeline_mode<synchronous>, transform_indices = @transform_6, window_bounds = array<i64: 1, 256>}, {pipeline_mode = #tpu.pipeline_mode<synchronous>, transform_indices = @transform_7, window_bounds = array<i64: 1, 256>}, {pipeline_mode = #tpu.pipeline_mode<synchronous>, transform_indices = @transform_8, window_bounds = array<i64: 1, 1>}, {transform_indices = @transform_9, window_bounds = array<i64: 128, 1>}]} {
    %c0 = arith.constant 0 : index
    %c0_0 = arith.constant 0 : index
    %0 = vector.load %arg1[%c0, %c0_0] : memref<128x4xbf16, #tpu.memory_space<vmem>>, vector<128x4xbf16>
    %c0_1 = arith.constant 0 : index
    %c0_2 = arith.constant 0 : index
    %1 = vector.load %arg2[%c0_1, %c0_2] : memref<4x256xbf16, #tpu.memory_space<vmem>>, vector<4x256xbf16>
    %cst = arith.constant dense<0.000000e+00> : vector<128x256xf32>
    %2 = tpu.matmul %0, %1, %cst {dimension_numbers = #tpu.dot_dimension_numbers<[1], [0], [0], [1], [0, 0, 1, 1], [], []>} : vector<128x4xbf16>, vector<4x256xbf16>, vector<128x256xf32> -> vector<128x256xf32>
    %c0_3 = arith.constant 0 : index
    %c0_4 = arith.constant 0 : index
    %3 = vector.load %arg3[%c0_3, %c0_4] : memref<1x256xf32, #tpu.memory_space<vmem>>, vector<1x256xf32>
    %4 = vector.broadcast %3 : vector<1x256xf32> to vector<128x256xf32>
    %5 = arith.addf %2, %4 : vector<128x256xf32>
    %cst_5 = arith.constant 0.000000e+00 : f32
    %6 = vector.broadcast %cst_5 : f32 to vector<128x256xf32>
    %7 = arith.maximumf %5, %6 : vector<128x256xf32>
    %8 = arith.truncf %7 : vector<128x256xf32> to vector<128x256xbf16>
    %c0_6 = arith.constant 0 : index
    %c0_7 = arith.constant 0 : index
    %9 = vector.load %arg4[%c0_6, %c0_7] : memref<256x256xbf16, #tpu.memory_space<vmem>>, vector<256x256xbf16>
    %cst_8 = arith.constant dense<0.000000e+00> : vector<128x256xf32>
    %10 = tpu.matmul %8, %9, %cst_8 {dimension_numbers = #tpu.dot_dimension_numbers<[1], [0], [0], [1], [0, 0, 1, 1], [], []>} : vector<128x256xbf16>, vector<256x256xbf16>, vector<128x256xf32> -> vector<128x256xf32>
    %c0_9 = arith.constant 0 : index
    %c0_10 = arith.constant 0 : index
    %11 = vector.load %arg5[%c0_9, %c0_10] : memref<1x256xf32, #tpu.memory_space<vmem>>, vector<1x256xf32>
    %12 = vector.broadcast %11 : vector<1x256xf32> to vector<128x256xf32>
    %13 = arith.addf %10, %12 : vector<128x256xf32>
    %cst_11 = arith.constant 0.000000e+00 : f32
    %14 = vector.broadcast %cst_11 : f32 to vector<128x256xf32>
    %15 = arith.maximumf %13, %14 : vector<128x256xf32>
    %16 = arith.truncf %15 : vector<128x256xf32> to vector<128x256xbf16>
    %c0_12 = arith.constant 0 : index
    %c0_13 = arith.constant 0 : index
    %17 = vector.load %arg6[%c0_12, %c0_13] : memref<256x256xbf16, #tpu.memory_space<vmem>>, vector<256x256xbf16>
    %cst_14 = arith.constant dense<0.000000e+00> : vector<128x256xf32>
    %18 = tpu.matmul %16, %17, %cst_14 {dimension_numbers = #tpu.dot_dimension_numbers<[1], [0], [0], [1], [0, 0, 1, 1], [], []>} : vector<128x256xbf16>, vector<256x256xbf16>, vector<128x256xf32> -> vector<128x256xf32>
    %c0_15 = arith.constant 0 : index
    %c0_16 = arith.constant 0 : index
    %19 = vector.load %arg7[%c0_15, %c0_16] : memref<1x256xf32, #tpu.memory_space<vmem>>, vector<1x256xf32>
    %20 = vector.broadcast %19 : vector<1x256xf32> to vector<128x256xf32>
    %21 = arith.addf %18, %20 : vector<128x256xf32>
    %cst_17 = arith.constant 0.000000e+00 : f32
    %22 = vector.broadcast %cst_17 : f32 to vector<128x256xf32>
    %23 = arith.maximumf %21, %22 : vector<128x256xf32>
    %c0_18 = arith.constant 0 : index
    %c0_19 = arith.constant 0 : index
    %24 = vector.load %arg8[%c0_18, %c0_19] : memref<1x256xf32, #tpu.memory_space<vmem>>, vector<1x256xf32>
    %25 = vector.broadcast %24 : vector<1x256xf32> to vector<128x256xf32>
    %26 = arith.mulf %23, %25 : vector<128x256xf32>
    %cst_20 = arith.constant dense<0.000000e+00> : vector<128xf32>
    %27 = vector.multi_reduction <add>, %26, %cst_20 [1] : vector<128x256xf32> to vector<128xf32>
    %28 = vector.shape_cast %27 : vector<128xf32> to vector<128x1xf32>
    %c0_21 = arith.constant 0 : index
    %c0_22 = arith.constant 0 : index
    %29 = vector.load %arg9[%c0_21, %c0_22] : memref<1x1xf32, #tpu.memory_space<vmem>>, vector<1x1xf32>
    %30 = vector.broadcast %29 : vector<1x1xf32> to vector<128x1xf32>
    %31 = arith.addf %28, %30 : vector<128x1xf32>
    %c0_23 = arith.constant 0 : index
    %c0_24 = arith.constant 0 : index
    %32 = vector.load %arg10[%c0_23, %c0_24] : memref<128x1xf32, #tpu.memory_space<vmem>>, vector<128x1xf32>
    tpu.vector_store %arg10[%c0_23, %c0_24], %31 {strides = array<i32>} : memref<128x1xf32, #tpu.memory_space<vmem>>, vector<128x1xf32>,
    return
  }
  func.func @transform_0(%arg0: i32) -> (i32, i32) {
    %c0_i32 = arith.constant 0 : i32
    %c0_i32_0 = arith.constant 0 : i32
    return %arg0, %c0_i32 : i32, i32
  }
  func.func @transform_1(%arg0: i32) -> (i32, i32) {
    %c0_i32 = arith.constant 0 : i32
    %c0_i32_0 = arith.constant 0 : i32
    %c0_i32_1 = arith.constant 0 : i32
    return %c0_i32, %c0_i32_0 : i32, i32
  }
  func.func @transform_2(%arg0: i32) -> (i32, i32) {
    %c0_i32 = arith.constant 0 : i32
    %c0_i32_0 = arith.constant 0 : i32
    %c0_i32_1 = arith.constant 0 : i32
    return %c0_i32, %c0_i32_0 : i32, i32
  }
  func.func @transform_3(%arg0: i32) -> (i32, i32) {
    %c0_i32 = arith.constant 0 : i32
    %c0_i32_0 = arith.constant 0 : i32
    %c0_i32_1 = arith.constant 0 : i32
    return %c0_i32, %c0_i32_0 : i32, i32
  }
  func.func @transform_4(%arg0: i32) -> (i32, i32) {
    %c0_i32 = arith.constant 0 : i32
    %c0_i32_0 = arith.constant 0 : i32
    %c0_i32_1 = arith.constant 0 : i32
    return %c0_i32, %c0_i32_0 : i32, i32
  }
  func.func @transform_5(%arg0: i32) -> (i32, i32) {
    %c0_i32 = arith.constant 0 : i32
    %c0_i32_0 = arith.constant 0 : i32
    %c0_i32_1 = arith.constant 0 : i32
    return %c0_i32, %c0_i32_0 : i32, i32
  }
  func.func @transform_6(%arg0: i32) -> (i32, i32) {
    %c0_i32 = arith.constant 0 : i32
    %c0_i32_0 = arith.constant 0 : i32
    %c0_i32_1 = arith.constant 0 : i32
    return %c0_i32, %c0_i32_0 : i32, i32
  }
  func.func @transform_7(%arg0: i32) -> (i32, i32) {
    %c0_i32 = arith.constant 0 : i32
    %c0_i32_0 = arith.constant 0 : i32
    %c0_i32_1 = arith.constant 0 : i32
    return %c0_i32, %c0_i32_0 : i32, i32
  }
  func.func @transform_8(%arg0: i32) -> (i32, i32) {
    %c0_i32 = arith.constant 0 : i32
    %c0_i32_0 = arith.constant 0 : i32
    %c0_i32_1 = arith.constant 0 : i32
    return %c0_i32, %c0_i32_0 : i32, i32
  }
  func.func @transform_9(%arg0: i32) -> (i32, i32) {
    %c0_i32 = arith.constant 0 : i32
    %c0_i32_0 = arith.constant 0 : i32
    return %arg0, %c0_i32 : i32, i32
  }
}

</mosaic_0001>

<llo_original>
// kernel: residual_critic_forward.1
$region0: #{residual_critic_forward.1}
  #allocation0 [shape = 'u32[]', space=smem, size = 0x4, offset = 0x4, fixed_abs, tag = 'smem constant byte address 0x4 - core index']
  #allocation1 [shape = 'u32[144,128]{1,0:T(1,128)}', space=vmem, size = 0x12000, scoped, tag = 'internal scratch']
  #allocation2 [shape = 'f32[1,1]{1,0:T(1,128)S(1)}', space=vmem, size = 0x200, scoped, tag = 'scoped memory for residual_critic_forward.1']
  %s0 = inlined_call_operand.vmem [shape: bf16[256,4], index: 0, kind: input, shape index: {}]
  %s1 = inlined_call_operand.vmem [shape: bf16[4,256], index: 1, kind: input, shape index: {}]
  %s2 = inlined_call_operand.vmem [shape: f32[1,256], index: 2, kind: input, shape index: {}]
  %s3 = inlined_call_operand.hbm [shape: bf16[256,256], index: 3, kind: input, shape index: {}]
  %s4 = inlined_call_operand.vmem [shape: f32[1,256], index: 4, kind: input, shape index: {}]
  %s5 = inlined_call_operand.hbm [shape: bf16[256,256], index: 5, kind: input, shape index: {}]
  %s6 = inlined_call_operand.vmem [shape: f32[1,256], index: 6, kind: input, shape index: {}]
  %s7 = inlined_call_operand.vmem [shape: f32[1,256], index: 7, kind: input, shape index: {}]
  %s8 = inlined_call_operand.<no memory space> [shape: f32[1,1], index: 8, kind: input, shape index: {}]
  %s9 = inlined_call_operand.vmem [shape: f32[256,1], index: 9, kind: output, shape index: {}]
  %s10 = sld [smem:[#allocation0]]
  $region77: #{residual_critic_forward.1} parent=0
    _
  %s12 = ssub.s32 1, %s10
  %s13 = scalar_select 0, %s12, %s10
  %v14 = vstv %s8
  %15 = vst [vmem:[#allocation2] sm:$0x1] %v14
  $region1: #{residual_critic_forward.1} parent=0
    #allocation3 [shape = 'u8[131072]{0}', space=vmem, size = 0x20000, scoped, tag = 'input window, operand 3, single buffered']
    #allocation4 [shape = 's32[2]{0}', space=sflag, size = 0x8, scoped, tag = 'scoped memory for residual_critic_forward.1']
    #allocation5 [shape = 'u8[131072]{0}', space=vmem, size = 0x20000, scoped, tag = 'input window, operand 5, single buffered']
    #allocation6 [shape = 's32[1]{0}', space=sflag, size = 0x4, scoped, tag = 'scoped memory for residual_critic_forward.1']
    %16 = vsyncpa [#allocation4], 0
    %17 = vsyncpa [#allocation6], 0
    loop: start=0, step=1, limit=4
    $region2: #{residual_critic_forward.1} parent=1 // loop_pre_header
      _
    $region3: #{residual_critic_forward.1} parent=1 // loop_header
      %s19 = sphi 0, %s23
      %p20 = scmp.ge.s32.totalorder %s19, 4
      %s29 = sphi 0, %s31
      %s32 = sphi 0, %s29
      %s33 = sphi 0, %s32
      %s49 = sphi 0, %s33
      %s53 = sphi 0, %s53
      %s55 = sphi 0, %s53
      %s56 = sphi 0, %s55
      %s70 = sphi 0, %s56
      %s74 = sphi 0, %s74
      %s76 = sphi 0, %s74
      %s77 = sphi 0, %s76
      %s91 = sphi 0, %s77
      %s95 = sphi 0, %s95
      %s97 = sphi 0, %s95
      %s98 = sphi 0, %s97
      %s112 = sphi 0, %s98
      %s116 = sphi 0, %s116
      %s118 = sphi 0, %s116
      %s119 = sphi 0, %s118
      %s133 = sphi 0, %s119
      %s137 = sphi 0, %s137
      %s139 = sphi 0, %s137
      %s140 = sphi 0, %s139
      %s154 = sphi 0, %s140
      %s158 = sphi 0, %s158
      %s160 = sphi 0, %s158
      %s161 = sphi 0, %s160
      %s175 = sphi 0, %s161
      %s179 = sphi 0, %s179
      %s181 = sphi 0, %s179
      %s182 = sphi 0, %s181
      %s196 = sphi 0, %s182
      %s200 = sphi 0, %s200
      %s202 = sphi 0, %s200
      %s203 = sphi 0, %s202
      %s217 = sphi 0, %s203
      %s223 = sphi 0, %s225
      %s226 = sphi 0, %s223
      %s227 = sphi 0, %s226
      %s243 = sphi 0, %s227
    $region4: #{residual_critic_forward.1} parent=1 // loop_header_branch
      %22 = sbr.rel (%p20) target = $region8
    $region5: #{residual_critic_forward.1} parent=1 // loop_body
      %s24 = ssub.s32 %s19, 1
      %s25 = ssub.s32 %s19, 2
      %s26 = sadd.s32 %s19, 1
      %s27 = ssub.s32 %s19, %s26
      %p28 = scmp.eq.s32.totalorder %s27, 0
      %s30 = sadd.s32 %s29, 1
      %s31 = scalar_select %p28, %s29, %s30
      %p34 = pneg %p28
      %p35 = scmp.eq.s32.totalorder %s19, 1
      %p36 = por %p34, %p35
      %p37 = scmp.ne.s32.totalorder %s29, %s32
      %p38 = scmp.eq.s32.totalorder %s19, 0
      %p39 = por %p37, %p38
      %p40 = scmp.ne.s32.totalorder %s29, %s32
      %p41 = scmp.eq.s32.totalorder %s24, 1
      %p42 = por %p40, %p41
      %p43 = scmp.ne.s32.totalorder %s32, %s33
      %p44 = scmp.eq.s32.totalorder %s24, 0
      %p45 = por %p43, %p44
      %p46 = scmp.ne.s32.totalorder %s32, %s33
      %p47 = scmp.eq.s32.totalorder %s25, 1
      %p48 = por %p46, %p47
      %p50 = scmp.ne.s32.totalorder %s33, %s49
      %p51 = scmp.eq.s32.totalorder %s25, 0
      %p52 = por %p50, %p51
      %s54 = sadd.s32 %s53, 1
      %p57 = scmp.eq.s32.totalorder %s19, 1
      %p58 = scmp.ne.s32.totalorder %s53, %s55
      %p59 = scmp.eq.s32.totalorder %s19, 0
      %p60 = por %p58, %p59
      %p61 = scmp.ne.s32.totalorder %s53, %s55
      %p62 = scmp.eq.s32.totalorder %s24, 1
      %p63 = por %p61, %p62
      %p64 = scmp.ne.s32.totalorder %s55, %s56
      %p65 = scmp.eq.s32.totalorder %s24, 0
      %p66 = por %p64, %p65
      %p67 = scmp.ne.s32.totalorder %s55, %s56
      %p68 = scmp.eq.s32.totalorder %s25, 1
      %p69 = por %p67, %p68
      %p71 = scmp.ne.s32.totalorder %s56, %s70
      %p72 = scmp.eq.s32.totalorder %s25, 0
      %p73 = por %p71, %p72
      %s75 = sadd.s32 %s74, 1
      %p78 = scmp.eq.s32.totalorder %s19, 1
      %p79 = scmp.ne.s32.totalorder %s74, %s76
      %p80 = scmp.eq.s32.totalorder %s19, 0
      %p81 = por %p79, %p80
      %p82 = scmp.ne.s32.totalorder %s74, %s76
      %p83 = scmp.eq.s32.totalorder %s24, 1
      %p84 = por %p82, %p83
      %p85 = scmp.ne.s32.totalorder %s76, %s77
      %p86 = scmp.eq.s32.totalorder %s24, 0
      %p87 = por %p85, %p86
      %p88 = scmp.ne.s32.totalorder %s76, %s77
      %p89 = scmp.eq.s32.totalorder %s25, 1
      %p90 = por %p88, %p89
      %p92 = scmp.ne.s32.totalorder %s77, %s91
      %p93 = scmp.eq.s32.totalorder %s25, 0
      %p94 = por %p92, %p93
      %s96 = sadd.s32 %s95, 1
      %p99 = scmp.eq.s32.totalorder %s19, 1
      %p100 = scmp.ne.s32.totalorder %s95, %s97
      %p101 = scmp.eq.s32.totalorder %s19, 0
      %p102 = por %p100, %p101
      %p103 = scmp.ne.s32.totalorder %s95, %s97
      %p104 = scmp.eq.s32.totalorder %s24, 1
      %p105 = por %p103, %p104
      %p106 = scmp.ne.s32.totalorder %s97, %s98
      %p107 = scmp.eq.s32.totalorder %s24, 0
      %p108 = por %p106, %p107
      %p109 = scmp.ne.s32.totalorder %s97, %s98
      %p110 = scmp.eq.s32.totalorder %s25, 1
      %p111 = por %p109, %p110
      %p113 = scmp.ne.s32.totalorder %s98, %s112
      %p114 = scmp.eq.s32.totalorder %s25, 0
      %p115 = por %p113, %p114
      %s117 = sadd.s32 %s116, 1
      %p120 = scmp.eq.s32.totalorder %s19, 1
      %p121 = scmp.ne.s32.totalorder %s116, %s118
      %p122 = scmp.eq.s32.totalorder %s19, 0
      %p123 = por %p121, %p122
      %p124 = scmp.ne.s32.totalorder %s116, %s118
      %p125 = scmp.eq.s32.totalorder %s24, 1
      %p126 = por %p124, %p125
      %p127 = scmp.ne.s32.totalorder %s118, %s119
      %p128 = scmp.eq.s32.totalorder %s24, 0
      %p129 = por %p127, %p128
      %p130 = scmp.ne.s32.totalorder %s118, %s119
      %p131 = scmp.eq.s32.totalorder %s25, 1
      %p132 = por %p130, %p131
      %p134 = scmp.ne.s32.totalorder %s119, %s133
      %p135 = scmp.eq.s32.totalorder %s25, 0
      %p136 = por %p134, %p135
      %s138 = sadd.s32 %s137, 1
      %p141 = scmp.eq.s32.totalorder %s19, 1
      %p142 = scmp.ne.s32.totalorder %s137, %s139
      %p143 = scmp.eq.s32.totalorder %s19, 0
      %p144 = por %p142, %p143
      %p145 = scmp.ne.s32.totalorder %s137, %s139
      %p146 = scmp.eq.s32.totalorder %s24, 1
      %p147 = por %p145, %p146
      %p148 = scmp.ne.s32.totalorder %s139, %s140
      %p149 = scmp.eq.s32.totalorder %s24, 0
      %p150 = por %p148, %p149
      %p151 = scmp.ne.s32.totalorder %s139, %s140
      %p152 = scmp.eq.s32.totalorder %s25, 1
      %p153 = por %p151, %p152
      %p155 = scmp.ne.s32.totalorder %s140, %s154
      %p156 = scmp.eq.s32.totalorder %s25, 0
      %p157 = por %p155, %p156
      %s159 = sadd.s32 %s158, 1
      %p162 = scmp.eq.s32.totalorder %s19, 1
      %p163 = scmp.ne.s32.totalorder %s158, %s160
      %p164 = scmp.eq.s32.totalorder %s19, 0
      %p165 = por %p163, %p164
      %p166 = scmp.ne.s32.totalorder %s158, %s160
      %p167 = scmp.eq.s32.totalorder %s24, 1
      %p168 = por %p166, %p167
      %p169 = scmp.ne.s32.totalorder %s160, %s161
      %p170 = scmp.eq.s32.totalorder %s24, 0
      %p171 = por %p169, %p170
      %p172 = scmp.ne.s32.totalorder %s160, %s161
      %p173 = scmp.eq.s32.totalorder %s25, 1
      %p174 = por %p172, %p173
      %p176 = scmp.ne.s32.totalorder %s161, %s175
      %p177 = scmp.eq.s32.totalorder %s25, 0
      %p178 = por %p176, %p177
      %s180 = sadd.s32 %s179, 1
      %p183 = scmp.eq.s32.totalorder %s19, 1
      %p184 = scmp.ne.s32.totalorder %s179, %s181
      %p185 = scmp.eq.s32.totalorder %s19, 0
      %p186 = por %p184, %p185
      %p187 = scmp.ne.s32.totalorder %s179, %s181
      %p188 = scmp.eq.s32.totalorder %s24, 1
      %p189 = por %p187, %p188
      %p190 = scmp.ne.s32.totalorder %s181, %s182
      %p191 = scmp.eq.s32.totalorder %s24, 0
      %p192 = por %p190, %p191
      %p193 = scmp.ne.s32.totalorder %s181, %s182
      %p194 = scmp.eq.s32.totalorder %s25, 1
      %p195 = por %p193, %p194
      %p197 = scmp.ne.s32.totalorder %s182, %s196
      %p198 = scmp.eq.s32.totalorder %s25, 0
      %p199 = por %p197, %p198
      %s201 = sadd.s32 %s200, 1
      %p204 = scmp.eq.s32.totalorder %s19, 1
      %p205 = scmp.ne.s32.totalorder %s200, %s202
      %p206 = scmp.eq.s32.totalorder %s19, 0
      %p207 = por %p205, %p206
      %p208 = scmp.ne.s32.totalorder %s200, %s202
      %p209 = scmp.eq.s32.totalorder %s24, 1
      %p210 = por %p208, %p209
      %p211 = scmp.ne.s32.totalorder %s202, %s203
      %p212 = scmp.eq.s32.totalorder %s24, 0
      %p213 = por %p211, %p212
      %p214 = scmp.ne.s32.totalorder %s202, %s203
      %p215 = scmp.eq.s32.totalorder %s25, 1
      %p216 = por %p214, %p215
      %p218 = scmp.ne.s32.totalorder %s203, %s217
      %p219 = scmp.eq.s32.totalorder %s25, 0
      %p220 = por %p218, %p219
      %s221 = ssub.s32 %s19, %s26
      %p222 = scmp.eq.s32.totalorder %s221, 0
      %s224 = sadd.s32 %s223, 1
      %s225 = scalar_select %p222, %s223, %s224
      %p228 = pneg %p222
      %p229 = scmp.eq.s32.totalorder %s19, 1
      %p230 = por %p228, %p229
      %p231 = scmp.ne.s32.totalorder %s223, %s226
      %p232 = scmp.eq.s32.totalorder %s19, 0
      %p233 = por %p231, %p232
      %p234 = scmp.ne.s32.totalorder %s223, %s226
      %p235 = scmp.eq.s32.totalorder %s24, 1
      %p236 = por %p234, %p235
      %p237 = scmp.ne.s32.totalorder %s226, %s227
      %p238 = scmp.eq.s32.totalorder %s24, 0
      %p239 = por %p237, %p238
      %p240 = scmp.ne.s32.totalorder %s226, %s227
      %p241 = scmp.eq.s32.totalorder %s25, 1
      %p242 = por %p240, %p241
      %p244 = scmp.ne.s32.totalorder %s227, %s243
      %p245 = scmp.eq.s32.totalorder %s25, 0
      %p246 = por %p244, %p245
      %p247 = scmp.le.s32.totalorder 1, %s19
      %p248 = scmp.lt.s32.totalorder %s19, 3
      %p249 = pnand %p247, %p248
      %p250 = pneg %p249
      // Predicated region
      $region9: #{residual_critic_forward.1} parent=5 // pred_check
        _
      $region10: #{residual_critic_forward.1} parent=5 // pred_check_branch
        %252 = sbr.rel (%p249) target = $region12
      $region11: #{residual_critic_forward.1} parent=5 // pred_region
        %s253 = ssub.s32 %s19, 1
        // Predicated region
        $region13: #{residual_critic_forward.1} parent=11 // pred_check
          %p254 = pneg %p66
        $region14: #{residual_critic_forward.1} parent=11 // pred_check_branch
          %256 = sbr.rel (%p254) target = $region16
        $region15: #{residual_critic_forward.1} parent=11 // pred_region
          _
        $region16: #{residual_critic_forward.1} parent=11 // pred_fallthru
          _
        // Predicated region
        $region17: #{residual_critic_forward.1} parent=11 // pred_check
          %p257 = pneg %p87
        $region18: #{residual_critic_forward.1} parent=11 // pred_check_branch
          %259 = sbr.rel (%p257) target = $region20
        $region19: #{residual_critic_forward.1} parent=11 // pred_region
          _
        $region20: #{residual_critic_forward.1} parent=11 // pred_fallthru
          _
        // Predicated region
        $region21: #{residual_critic_forward.1} parent=11 // pred_check
          %p260 = pneg %p108
        $region22: #{residual_critic_forward.1} parent=11 // pred_check_branch
          %262 = sbr.rel (%p260) target = $region24
        $region23: #{residual_critic_forward.1} parent=11 // pred_region
          %s264 = ssub.s32 4096, 4096
          %265 = vsyncadd [#allocation4], %s264
          %s266 = sshll.u32 [#allocation3], 4
          %s267 = int_to_ptr.vmem [resolvable:$true] %s266
          %272 = dma.hbm_to_vmem [thread:$0]  %s3, 4096, %s267, [#allocation4], 128, 128, 8
        $region24: #{residual_critic_forward.1} parent=11 // pred_fallthru
          _
        // Predicated region
        $region25: #{residual_critic_forward.1} parent=11 // pred_check
          %p273 = pneg %p129
        $region26: #{residual_critic_forward.1} parent=11 // pred_check_branch
          %275 = sbr.rel (%p273) target = $region28
        $region27: #{residual_critic_forward.1} parent=11 // pred_region
          _
        $region28: #{residual_critic_forward.1} parent=11 // pred_fallthru
          _
        // Predicated region
        $region29: #{residual_critic_forward.1} parent=11 // pred_check
          %p276 = pneg %p150
        $region30: #{residual_critic_forward.1} parent=11 // pred_check_branch
          %278 = sbr.rel (%p276) target = $region32
        $region31: #{residual_critic_forward.1} parent=11 // pred_region
          %s280 = ssub.s32 4096, 4096
          %281 = vsyncadd [#allocation6], %s280
          %s282 = sshll.u32 [#allocation5], 4
          %s283 = int_to_ptr.vmem [resolvable:$true] %s282
          %288 = dma.hbm_to_vmem [thread:$0]  %s5, 4096, %s283, [#allocation6], 128, 128, 8
        $region32: #{residual_critic_forward.1} parent=11 // pred_fallthru
          _
        // Predicated region
        $region33: #{residual_critic_forward.1} parent=11 // pred_check
          %p289 = pneg %p171
        $region34: #{residual_critic_forward.1} parent=11 // pred_check_branch
          %291 = sbr.rel (%p289) target = $region36
        $region35: #{residual_critic_forward.1} parent=11 // pred_region
          _
        $region36: #{residual_critic_forward.1} parent=11 // pred_fallthru
          _
        // Predicated region
        $region37: #{residual_critic_forward.1} parent=11 // pred_check
          %p292 = pneg %p192
        $region38: #{residual_critic_forward.1} parent=11 // pred_check_branch
          %294 = sbr.rel (%p292) target = $region40
        $region39: #{residual_critic_forward.1} parent=11 // pred_region
          _
        $region40: #{residual_critic_forward.1} parent=11 // pred_fallthru
          _
        // Predicated region
        $region41: #{residual_critic_forward.1} parent=11 // pred_check
          %p295 = pneg %p213
        $region42: #{residual_critic_forward.1} parent=11 // pred_check_branch
          %297 = sbr.rel (%p295) target = $region44
        $region43: #{residual_critic_forward.1} parent=11 // pred_region
          _
        $region44: #{residual_critic_forward.1} parent=11 // pred_fallthru
          _
      $region12: #{residual_critic_forward.1} parent=5 // pred_fallthru
        _
      %p298 = scmp.lt.s32.totalorder %s19, 2
      // Predicated region
      $region45: #{residual_critic_forward.1} parent=5 // pred_check
        %p299 = pneg %p298
      $region46: #{residual_critic_forward.1} parent=5 // pred_check_branch
        %301 = sbr.rel (%p299) target = $region48
      $region47: #{residual_critic_forward.1} parent=5 // pred_region
        // Predicated region
        $region49: #{residual_critic_forward.1} parent=47 // pred_check
          %p302 = pneg %p39
        $region50: #{residual_critic_forward.1} parent=47 // pred_check_branch
          %304 = sbr.rel (%p302) target = $region52
        $region51: #{residual_critic_forward.1} parent=47 // pred_region
          %s305 = smul.u32 16, %s19
          %p306 = scmp.lt.s32.totalorder %s305, 31
          %s307 = scalar_select %p306, %s305, 31
          %s308 = smul.addr %s307, 4
          %s309 = scalar_lea.vmem %s0, %s308
          %s310 = smul.u32 16, %s19
        $region52: #{residual_critic_forward.1} parent=47 // pred_fallthru
          _
      $region48: #{residual_critic_forward.1} parent=5 // pred_fallthru
        _
      %p311 = scmp.le.s32.totalorder 1, %s19
      %p312 = scmp.lt.s32.totalorder %s19, 3
      %p313 = pnand %p311, %p312
      %p314 = pneg %p313
      // Predicated region
      $region53: #{residual_critic_forward.1} parent=5 // pred_check
        _
      $region54: #{residual_critic_forward.1} parent=5 // pred_check_branch
        %316 = sbr.rel (%p313) target = $region56
      $region55: #{residual_critic_forward.1} parent=5 // pred_region
        %s317 = ssub.s32 %s19, 1
        // Predicated region
        $region57: #{residual_critic_forward.1} parent=55 // pred_check
          %p318 = pneg %p108
        $region58: #{residual_critic_forward.1} parent=55 // pred_check_branch
          %320 = sbr.rel (%p318) target = $region60
        $region59: #{residual_critic_forward.1} parent=55 // pred_region
          %321 = dma.done [#allocation4], 4096
        $region60: #{residual_critic_forward.1} parent=55 // pred_fallthru
          _
        // Predicated region
        $region61: #{residual_critic_forward.1} parent=55 // pred_check
          %p322 = pneg %p150
        $region62: #{residual_critic_forward.1} parent=55 // pred_check_branch
          %324 = sbr.rel (%p322) target = $region64
        $region63: #{residual_critic_forward.1} parent=55 // pred_region
          %325 = dma.done [#allocation6], 4096
        $region64: #{residual_critic_forward.1} parent=55 // pred_fallthru
          _
        %s326 = smul.u32 16, %s24
        %p327 = scmp.lt.s32.totalorder %s326, 31
        %s328 = scalar_select %p327, %s326, 31
        %s329 = smul.addr %s328, 4
        %s330 = scalar_lea.vmem %s0, %s329
        %p331 = pneg %p45
        %p332 = pneg %p42
        %p333 = pneg %p66
        %p334 = pneg %p63
        %p335 = pneg %p87
        %p336 = pneg %p84
        %p337 = pneg %p108
        %p338 = pneg %p105
        %p339 = pneg %p129
        %p340 = pneg %p126
        %p341 = pneg %p150
        %p342 = pneg %p147
        %p343 = pneg %p171
        %p344 = pneg %p168
        %p345 = pneg %p192
        %p346 = pneg %p189
        %p347 = pneg %p213
        %p348 = pneg %p210
        %p349 = pneg %p239
        %p350 = pneg %p236
        %s351 = smul.u32 16, %s24
        %p352 = scmp.lt.s32.totalorder %s351, 31
        %s353 = scalar_select %p352, %s351, 31
        %s354 = smul.addr %s353, 8
        %s355 = scalar_lea.vmem %s9, %s354
        %s356 = smul.u32 16, %s24
        %p357 = scmp.lt.s32.totalorder %s356, 31
        %s358 = scalar_select %p357, %s356, 31
        %s359 = smul.addr %s358, 4
        %s360 = scalar_lea.vmem %s0, %s359
        %s361 = smul.u32 16, %s24
        %s362 = smul.u32 16, %s24
        %p363 = scmp.lt.s32.totalorder %s362, 31
        %s364 = scalar_select %p363, %s362, 31
        %s365 = smul.addr %s364, 8
        %s366 = scalar_lea.vmem %s9, %s365
        %s367 = smul.u32 16, %s24
        %v369 = vld [vmem:[%s360] sm:$0xf]
        %v370 = vld [vmem:[%s360 + $0x4] sm:$0xf]
        %v371 = vld [vmem:[%s360 + $0x8] sm:$0xf]
        %v372 = vld [vmem:[%s360 + $0xc] sm:$0xf]
        %v373 = vld [vmem:[%s360 + $0x10] sm:$0xf]
        %v374 = vld [vmem:[%s360 + $0x14] sm:$0xf]
        %v375 = vld [vmem:[%s360 + $0x18] sm:$0xf]
        %v376 = vld [vmem:[%s360 + $0x1c] sm:$0xf]
        %v377 = vld [vmem:[%s360 + $0x20] sm:$0xf]
        %v378 = vld [vmem:[%s360 + $0x24] sm:$0xf]
        %v379 = vld [vmem:[%s360 + $0x28] sm:$0xf]
        %v380 = vld [vmem:[%s360 + $0x2c] sm:$0xf]
        %v381 = vld [vmem:[%s360 + $0x30] sm:$0xf]
        %v382 = vld [vmem:[%s360 + $0x34] sm:$0xf]
        %v383 = vld [vmem:[%s360 + $0x38] sm:$0xf]
        %v384 = vld [vmem:[%s360 + $0x3c] sm:$0xf]
        %v385 = vld [vmem:[%s1] sm:$0xf]
        %v386 = vld [vmem:[%s2] sm:$0x3]
        %v388 = vlaneseq
        %v389 = vshrl.u32 %v388, 7
        %v390 = vsub.s32 0, %v389
        %v391 = vrot.slane %v386, %v390
        %v392 = vlaneseq
        %v393 = vshrl.u32 %v392, 7
        %v394 = vsub.s32 1, %v393
        %v395 = vrot.slane %v386, %v394
        %v414 = vunpack.c.l.b16 %v369
        %v415 = vunpack.c.l.b16 %v370
        %v416 = vunpack.c.l.b16 %v371
        %v417 = vunpack.c.l.b16 %v372
        %v418 = vunpack.c.l.b16 %v373
        %v419 = vunpack.c.l.b16 %v374
        %v420 = vunpack.c.l.b16 %v375
        %v421 = vunpack.c.l.b16 %v376
        %v422 = vunpack.c.l.b16 %v377
        %v423 = vunpack.c.l.b16 %v378
        %v424 = vunpack.c.l.b16 %v379
        %v425 = vunpack.c.l.b16 %v380
        %v426 = vunpack.c.l.b16 %v381
        %v427 = vunpack.c.l.b16 %v382
        %v428 = vunpack.c.l.b16 %v383
        %v429 = vunpack.c.l.b16 %v384
        %v430 = vpack.c.b16 %v415, %v414
        %v431 = vpack.c.b16 %v417, %v416
        %v432 = vpack.c.b16 %v419, %v418
        %v433 = vpack.c.b16 %v421, %v420
        %v434 = vpack.c.b16 %v423, %v422
        %v435 = vpack.c.b16 %v425, %v424
        %v436 = vpack.c.b16 %v427, %v426
        %v437 = vpack.c.b16 %v429, %v428
        %v440 = vunpack.c.l.s4 1983009808
        %v441 = vunpack.c.0.s8 %v440
        %v442 = vlaneseq
        %v443 = vshrl.u32 %v442, 7
        %v444 = vsub.s32 %v441, %v443
        %v445 = vrot.slane %v385, %v444
        %v446 = vcombine.high %v445, %v445
        %vm447 = vcmask 31744
        %v449 = vsel %vm447, %v430, 0
        %v452 = vsel %vm447, %v431, 0
        %v455 = vsel %vm447, %v432, 0
        %v458 = vsel %vm447, %v433, 0
        %v461 = vsel %vm447, %v434, 0
        %v464 = vsel %vm447, %v435, 0
        %v467 = vsel %vm447, %v436, 0
        %v470 = vsel %vm447, %v437, 0
        %vm472 = vcmask 1041408
        %v474 = vsel %vm472, %v445, 0
        %v477 = vsel %vm472, %v446, 0
        %479 = vmatprep.subr.bf16.mxu0 0
        %480 = vmatpush1.bf16.msra.mxu0 0
        %481 = vmatprep.subr.bf16.mxu0 0
        %482 = vmatpush1.bf16.msra.mxu0 0
        %483 = vmatprep.subr.bf16.mxu0 0
        %484 = vmatpush1.bf16.msra.mxu0 0
        %485 = vmatprep.subr.bf16.mxu0 0
        %486 = vmatpush1.bf16.msra.mxu0 0
        %487 = vmatprep.subr.bf16.mxu0 0
        %488 = vmatpush1.bf16.msra.mxu0 0
        %489 = vmatprep.subr.bf16.mxu0 0
        %490 = vmatpush1.bf16.msra.mxu0 0
        %491 = vmatprep.subr.bf16.mxu0 0
        %492 = vmatpush1.bf16.msra.mxu0 0
        %493 = vmatprep.subr.bf16.mxu0 %v477
        %494 = vmatpush1.bf16.msra.mxu0 %v474
        %495 = vmatprep.subr.bf16.mxu0 0
        %496 = vmatpush2.bf16.msra.mxu0 0
        %497 = vmatprep.subr.bf16.mxu0 0
        %498 = vmatpush2.bf16.msra.mxu0 0
        %499 = vmatprep.subr.bf16.mxu0 0
        %500 = vmatpush2.bf16.msra.mxu0 0
        %501 = vmatprep.subr.bf16.mxu0 0
        %502 = vmatpush2.bf16.msra.mxu0 0
        %503 = vmatprep.subr.bf16.mxu0 0
        %504 = vmatpush2.bf16.msra.mxu0 0
        %505 = vmatprep.subr.bf16.mxu0 0
        %506 = vmatpush2.bf16.msra.mxu0 0
        %507 = vmatprep.subr.bf16.mxu0 0
        %508 = vmatpush2.bf16.msra.mxu0 0
        %509 = vmatprep.subr.bf16.mxu0 0
        %510 = vmatpush2.bf16.msra.mxu0 0
        %511 = vmatprep.mubr.bf16.mxu0 0
        %512 = vmatmul.mubr.bf16.gmra.mxu0 %v449
        %v513 = vpop.f32.mrf.mxu0
        %v514 = vadd.f32 %v391, %v513
        %v515 = vpop.f32.mrf.mxu0
        %v516 = vadd.f32 %v395, %v515
        %v517 = vpop.f32.mrf.mxu0
        %v518 = vadd.f32 %v391, %v517
        %v519 = vpop.f32.mrf.mxu0
        %v520 = vadd.f32 %v395, %v519
        %521 = vmatprep.mubr.bf16.mxu0 0
        %522 = vmatmul.mubr.bf16.gmra.mxu0 %v452
        %v523 = vpop.f32.mrf.mxu0
        %v524 = vadd.f32 %v391, %v523
        %v525 = vpop.f32.mrf.mxu0
        %v526 = vadd.f32 %v395, %v525
        %v527 = vpop.f32.mrf.mxu0
        %v528 = vadd.f32 %v391, %v527
        %v529 = vpop.f32.mrf.mxu0
        %v530 = vadd.f32 %v395, %v529
        %531 = vmatprep.mubr.bf16.mxu0 0
        %532 = vmatmul.mubr.bf16.gmra.mxu0 %v455
        %v533 = vpop.f32.mrf.mxu0
        %v534 = vadd.f32 %v391, %v533
        %v535 = vpop.f32.mrf.mxu0
        %v536 = vadd.f32 %v395, %v535
        %v537 = vpop.f32.mrf.mxu0
        %v538 = vadd.f32 %v391, %v537
        %v539 = vpop.f32.mrf.mxu0
        %v540 = vadd.f32 %v395, %v539
        %541 = vmatprep.mubr.bf16.mxu0 0
        %542 = vmatmul.mubr.bf16.gmra.mxu0 %v458
        %v543 = vpop.f32.mrf.mxu0
        %v544 = vadd.f32 %v391, %v543
        %v545 = vpop.f32.mrf.mxu0
        %v546 = vadd.f32 %v395, %v545
        %v547 = vpop.f32.mrf.mxu0
        %v548 = vadd.f32 %v391, %v547
        %v549 = vpop.f32.mrf.mxu0
        %v550 = vadd.f32 %v395, %v549
        %551 = vmatprep.mubr.bf16.mxu0 0
        %552 = vmatmul.mubr.bf16.gmra.mxu0 %v461
        %v553 = vpop.f32.mrf.mxu0
        %v554 = vadd.f32 %v391, %v553
        %v555 = vpop.f32.mrf.mxu0
        %v556 = vadd.f32 %v395, %v555
        %v557 = vpop.f32.mrf.mxu0
        %v558 = vadd.f32 %v391, %v557
        %v559 = vpop.f32.mrf.mxu0
        %v560 = vadd.f32 %v395, %v559
        %561 = vmatprep.mubr.bf16.mxu0 0
        %562 = vmatmul.mubr.bf16.gmra.mxu0 %v464
        %v563 = vpop.f32.mrf.mxu0
        %v564 = vadd.f32 %v391, %v563
        %v565 = vpop.f32.mrf.mxu0
        %v566 = vadd.f32 %v395, %v565
        %v567 = vpop.f32.mrf.mxu0
        %v568 = vadd.f32 %v391, %v567
        %v569 = vpop.f32.mrf.mxu0
        %v570 = vadd.f32 %v395, %v569
        %571 = vmatprep.mubr.bf16.mxu0 0
        %572 = vmatmul.mubr.bf16.gmra.mxu0 %v467
        %v573 = vpop.f32.mrf.mxu0
        %v574 = vadd.f32 %v391, %v573
        %v575 = vpop.f32.mrf.mxu0
        %v576 = vadd.f32 %v395, %v575
        %v577 = vpop.f32.mrf.mxu0
        %v578 = vadd.f32 %v391, %v577
        %v579 = vpop.f32.mrf.mxu0
        %v580 = vadd.f32 %v395, %v579
        %581 = vmatprep.mubr.bf16.mxu0 0
        %582 = vmatmul.mubr.bf16.gmra.mxu0 %v470
        %v583 = vpop.f32.mrf.mxu0
        %v584 = vadd.f32 %v391, %v583
        %v585 = vpop.f32.mrf.mxu0
        %v586 = vadd.f32 %v395, %v585
        %v587 = vpop.f32.mrf.mxu0
        %v588 = vadd.f32 %v391, %v587
        %v589 = vpop.f32.mrf.mxu0
        %v590 = vadd.f32 %v395, %v589
        %591 = vdwg.mxu0
        %v592 = vmax.f32 %v514, 0.0
        %v593 = vmax.f32 %v516, 0.0
        %v594 = vmax.f32 %v518, 0.0
        %v595 = vmax.f32 %v520, 0.0
        %v596 = vmax.f32 %v524, 0.0
        %v597 = vmax.f32 %v526, 0.0
        %v598 = vmax.f32 %v528, 0.0
        %v599 = vmax.f32 %v530, 0.0
        %v600 = vmax.f32 %v534, 0.0
        %v601 = vmax.f32 %v536, 0.0
        %v602 = vmax.f32 %v538, 0.0
        %v603 = vmax.f32 %v540, 0.0
        %v604 = vmax.f32 %v544, 0.0
        %v605 = vmax.f32 %v546, 0.0
        %v606 = vmax.f32 %v548, 0.0
        %v607 = vmax.f32 %v550, 0.0
        %v608 = vmax.f32 %v554, 0.0
        %v609 = vmax.f32 %v556, 0.0
        %v610 = vmax.f32 %v558, 0.0
        %v611 = vmax.f32 %v560, 0.0
        %v612 = vmax.f32 %v564, 0.0
        %v613 = vmax.f32 %v566, 0.0
        %v614 = vmax.f32 %v568, 0.0
        %v615 = vmax.f32 %v570, 0.0
        %v616 = vmax.f32 %v574, 0.0
        %v617 = vmax.f32 %v576, 0.0
        %v618 = vmax.f32 %v578, 0.0
        %v619 = vmax.f32 %v580, 0.0
        %v620 = vmax.f32 %v584, 0.0
        %v621 = vmax.f32 %v586, 0.0
        %v622 = vmax.f32 %v588, 0.0
        %v623 = vmax.f32 %v590, 0.0
        %v624 = vpack.c.bf16 %v594, %v592
        %v625 = vpack.c.bf16 %v595, %v593
        %v626 = vpack.c.bf16 %v598, %v596
        %v627 = vpack.c.bf16 %v599, %v597
        %v628 = vpack.c.bf16 %v602, %v600
        %v629 = vpack.c.bf16 %v603, %v601
        %v630 = vpack.c.bf16 %v606, %v604
        %v631 = vpack.c.bf16 %v607, %v605
        %v632 = vpack.c.bf16 %v610, %v608
        %v633 = vpack.c.bf16 %v611, %v609
        %v634 = vpack.c.bf16 %v614, %v612
        %v635 = vpack.c.bf16 %v615, %v613
        %v636 = vpack.c.bf16 %v618, %v616
        %v637 = vpack.c.bf16 %v619, %v617
        %v638 = vpack.c.bf16 %v622, %v620
        %v639 = vpack.c.bf16 %v623, %v621
        %v640 = vld [vmem:[#allocation3] sm:$0xff]
        %v641 = vld [vmem:[#allocation3 + $0x8] sm:$0xff]
        %v642 = vld [vmem:[#allocation3 + $0x10] sm:$0xff]
        %v643 = vld [vmem:[#allocation3 + $0x18] sm:$0xff]
        %v644 = vld [vmem:[#allocation3 + $0x20] sm:$0xff]
        %v645 = vld [vmem:[#allocation3 + $0x28] sm:$0xff]
        %v646 = vld [vmem:[#allocation3 + $0x30] sm:$0xff]
        %v647 = vld [vmem:[#allocation3 + $0x38] sm:$0xff]
        %v648 = vld [vmem:[#allocation3 + $0x40] sm:$0xff]
        %v649 = vld [vmem:[#allocation3 + $0x48] sm:$0xff]
        %v650 = vld [vmem:[#allocation3 + $0x50] sm:$0xff]
        %v651 = vld [vmem:[#allocation3 + $0x58] sm:$0xff]
        %v652 = vld [vmem:[#allocation3 + $0x60] sm:$0xff]
        %v653 = vld [vmem:[#allocation3 + $0x68] sm:$0xff]
        %v654 = vld [vmem:[#allocation3 + $0x70] sm:$0xff]
        %v655 = vld [vmem:[#allocation3 + $0x78] sm:$0xff]
        %v656 = vld [vmem:[#allocation3 + $0x80] sm:$0xff]
        %v657 = vld [vmem:[#allocation3 + $0x88] sm:$0xff]
        %v658 = vld [vmem:[#allocation3 + $0x90] sm:$0xff]
        %v659 = vld [vmem:[#allocation3 + $0x98] sm:$0xff]
        %v660 = vld [vmem:[#allocation3 + $0xa0] sm:$0xff]
        %v661 = vld [vmem:[#allocation3 + $0xa8] sm:$0xff]
        %v662 = vld [vmem:[#allocation3 + $0xb0] sm:$0xff]
        %v663 = vld [vmem:[#allocation3 + $0xb8] sm:$0xff]
        %v664 = vld [vmem:[#allocation3 + $0xc0] sm:$0xff]
        %v665 = vld [vmem:[#allocation3 + $0xc8] sm:$0xff]
        %v666 = vld [vmem:[#allocation3 + $0xd0] sm:$0xff]
        %v667 = vld [vmem:[#allocation3 + $0xd8] sm:$0xff]
        %v668 = vld [vmem:[#allocation3 + $0xe0] sm:$0xff]
        %v669 = vld [vmem:[#allocation3 + $0xe8] sm:$0xff]
        %v670 = vld [vmem:[#allocation3 + $0xf0] sm:$0xff]
        %v671 = vld [vmem:[#allocation3 + $0xf8] sm:$0xff]
        %v672 = vld [vmem:[%s4] sm:$0x3]
        %v674 = vlaneseq
        %v675 = vshrl.u32 %v674, 7
        %v676 = vsub.s32 0, %v675
        %v677 = vrot.slane %v672, %v676
        %v678 = vlaneseq
        %v679 = vshrl.u32 %v678, 7
        %v680 = vsub.s32 1, %v679
        %v681 = vrot.slane %v672, %v680
        %v716 = vunpack.c.l.b16 %v640
        %v717 = vunpack.c.h.b16 %v640
        %v718 = vunpack.c.l.b16 %v641
        %v719 = vunpack.c.h.b16 %v641
        %v720 = vunpack.c.l.b16 %v642
        %v721 = vunpack.c.h.b16 %v642
        %v722 = vunpack.c.l.b16 %v643
        %v723 = vunpack.c.h.b16 %v643
        %v724 = vunpack.c.l.b16 %v644
        %v725 = vunpack.c.h.b16 %v644
        %v726 = vunpack.c.l.b16 %v645
        %v727 = vunpack.c.h.b16 %v645
        %v728 = vunpack.c.l.b16 %v646
        %v729 = vunpack.c.h.b16 %v646
        %v730 = vunpack.c.l.b16 %v647
        %v731 = vunpack.c.h.b16 %v647
        %v732 = vunpack.c.l.b16 %v648
        %v733 = vunpack.c.h.b16 %v648
        %v734 = vunpack.c.l.b16 %v649
        %v735 = vunpack.c.h.b16 %v649
        %v736 = vunpack.c.l.b16 %v650
        %v737 = vunpack.c.h.b16 %v650
        %v738 = vunpack.c.l.b16 %v651
        %v739 = vunpack.c.h.b16 %v651
        %v740 = vunpack.c.l.b16 %v652
        %v741 = vunpack.c.h.b16 %v652
        %v742 = vunpack.c.l.b16 %v653
        %v743 = vunpack.c.h.b16 %v653
        %v744 = vunpack.c.l.b16 %v654
        %v745 = vunpack.c.h.b16 %v654
        %v746 = vunpack.c.l.b16 %v655
        %v747 = vunpack.c.h.b16 %v655
        %v748 = vunpack.c.l.b16 %v656
        %v749 = vunpack.c.h.b16 %v656
        %v750 = vunpack.c.l.b16 %v657
        %v751 = vunpack.c.h.b16 %v657
        %v752 = vunpack.c.l.b16 %v658
        %v753 = vunpack.c.h.b16 %v658
        %v754 = vunpack.c.l.b16 %v659
        %v755 = vunpack.c.h.b16 %v659
        %v756 = vunpack.c.l.b16 %v660
        %v757 = vunpack.c.h.b16 %v660
        %v758 = vunpack.c.l.b16 %v661
        %v759 = vunpack.c.h.b16 %v661
        %v760 = vunpack.c.l.b16 %v662
        %v761 = vunpack.c.h.b16 %v662
        %v762 = vunpack.c.l.b16 %v663
        %v763 = vunpack.c.h.b16 %v663
        %v764 = vunpack.c.l.b16 %v664
        %v765 = vunpack.c.h.b16 %v664
        %v766 = vunpack.c.l.b16 %v665
        %v767 = vunpack.c.h.b16 %v665
        %v768 = vunpack.c.l.b16 %v666
        %v769 = vunpack.c.h.b16 %v666
        %v770 = vunpack.c.l.b16 %v667
        %v771 = vunpack.c.h.b16 %v667
        %v772 = vunpack.c.l.b16 %v668
        %v773 = vunpack.c.h.b16 %v668
        %v774 = vunpack.c.l.b16 %v669
        %v775 = vunpack.c.h.b16 %v669
        %v776 = vunpack.c.l.b16 %v670
        %v777 = vunpack.c.h.b16 %v670
        %v778 = vunpack.c.l.b16 %v671
        %v779 = vunpack.c.h.b16 %v671
        %v780 = vpack.c.b16 %v718, %v716
        %v781 = vpack.c.b16 %v719, %v717
        %v782 = vpack.c.b16 %v722, %v720
        %v783 = vpack.c.b16 %v723, %v721
        %v784 = vpack.c.b16 %v726, %v724
        %v785 = vpack.c.b16 %v727, %v725
        %v786 = vpack.c.b16 %v730, %v728
        %v787 = vpack.c.b16 %v731, %v729
        %v788 = vpack.c.b16 %v734, %v732
        %v789 = vpack.c.b16 %v735, %v733
        %v790 = vpack.c.b16 %v738, %v736
        %v791 = vpack.c.b16 %v739, %v737
        %v792 = vpack.c.b16 %v742, %v740
        %v793 = vpack.c.b16 %v743, %v741
        %v794 = vpack.c.b16 %v746, %v744
        %v795 = vpack.c.b16 %v747, %v745
        %v796 = vpack.c.b16 %v750, %v748
        %v797 = vpack.c.b16 %v751, %v749
        %v798 = vpack.c.b16 %v754, %v752
        %v799 = vpack.c.b16 %v755, %v753
        %v800 = vpack.c.b16 %v758, %v756
        %v801 = vpack.c.b16 %v759, %v757
        %v802 = vpack.c.b16 %v762, %v760
        %v803 = vpack.c.b16 %v763, %v761
        %v804 = vpack.c.b16 %v766, %v764
        %v805 = vpack.c.b16 %v767, %v765
        %v806 = vpack.c.b16 %v770, %v768
        %v807 = vpack.c.b16 %v771, %v769
        %v808 = vpack.c.b16 %v774, %v772
        %v809 = vpack.c.b16 %v775, %v773
        %v810 = vpack.c.b16 %v778, %v776
        %v811 = vpack.c.b16 %v779, %v777
        %844 = vmatprep.subr.bf16.mxu0 %v795
        %845 = vmatpush1.bf16.msra.mxu0 %v794
        %846 = vmatprep.subr.bf16.mxu0 %v793
        %847 = vmatpush1.bf16.msra.mxu0 %v792
        %848 = vmatprep.subr.bf16.mxu0 %v791
        %849 = vmatpush1.bf16.msra.mxu0 %v790
        %850 = vmatprep.subr.bf16.mxu0 %v789
        %851 = vmatpush1.bf16.msra.mxu0 %v788
        %852 = vmatprep.subr.bf16.mxu0 %v787
        %853 = vmatpush1.bf16.msra.mxu0 %v786
        %854 = vmatprep.subr.bf16.mxu0 %v785
        %855 = vmatpush1.bf16.msra.mxu0 %v784
        %856 = vmatprep.subr.bf16.mxu0 %v783
        %857 = vmatpush1.bf16.msra.mxu0 %v782
        %858 = vmatprep.subr.bf16.mxu0 %v781
        %859 = vmatpush1.bf16.msra.mxu0 %v780
        %860 = vmatprep.subr.bf16.mxu0 %v811
        %861 = vmatpush2.bf16.msra.mxu0 %v810
        %862 = vmatprep.subr.bf16.mxu0 %v809
        %863 = vmatpush2.bf16.msra.mxu0 %v808
        %864 = vmatprep.subr.bf16.mxu0 %v807
        %865 = vmatpush2.bf16.msra.mxu0 %v806
        %866 = vmatprep.subr.bf16.mxu0 %v805
        %867 = vmatpush2.bf16.msra.mxu0 %v804
        %868 = vmatprep.subr.bf16.mxu0 %v803
        %869 = vmatpush2.bf16.msra.mxu0 %v802
        %870 = vmatprep.subr.bf16.mxu0 %v801
        %871 = vmatpush2.bf16.msra.mxu0 %v800
        %872 = vmatprep.subr.bf16.mxu0 %v799
        %873 = vmatpush2.bf16.msra.mxu0 %v798
        %874 = vmatprep.subr.bf16.mxu0 %v797
        %875 = vmatpush2.bf16.msra.mxu0 %v796
        %876 = vmatprep.mubr.bf16.mxu0 %v625
        %877 = vmatmul.mubr.bf16.gmra.mxu0 %v624
        %v878 = vpop.f32.mrf.mxu0
        %v879 = vadd.f32 %v677, %v878
        %v880 = vpop.f32.mrf.mxu0
        %v881 = vadd.f32 %v681, %v880
        %v882 = vpop.f32.mrf.mxu0
        %v883 = vadd.f32 %v677, %v882
        %v884 = vpop.f32.mrf.mxu0
        %v885 = vadd.f32 %v681, %v884
        %886 = vmatprep.mubr.bf16.mxu0 %v627
        %887 = vmatmul.mubr.bf16.gmra.mxu0 %v626
        %v888 = vpop.f32.mrf.mxu0
        %v889 = vadd.f32 %v677, %v888
        %v890 = vpop.f32.mrf.mxu0
        %v891 = vadd.f32 %v681, %v890
        %v892 = vpop.f32.mrf.mxu0
        %v893 = vadd.f32 %v677, %v892
        %v894 = vpop.f32.mrf.mxu0
        %v895 = vadd.f32 %v681, %v894
        %896 = vmatprep.mubr.bf16.mxu0 %v629
        %897 = vmatmul.mubr.bf16.gmra.mxu0 %v628
        %v898 = vpop.f32.mrf.mxu0
        %v899 = vadd.f32 %v677, %v898
        %v900 = vpop.f32.mrf.mxu0
        %v901 = vadd.f32 %v681, %v900
        %v902 = vpop.f32.mrf.mxu0
        %v903 = vadd.f32 %v677, %v902
        %v904 = vpop.f32.mrf.mxu0
        %v905 = vadd.f32 %v681, %v904
        %906 = vmatprep.mubr.bf16.mxu0 %v631
        %907 = vmatmul.mubr.bf16.gmra.mxu0 %v630
        %v908 = vpop.f32.mrf.mxu0
        %v909 = vadd.f32 %v677, %v908
        %v910 = vpop.f32.mrf.mxu0
        %v911 = vadd.f32 %v681, %v910
        %v912 = vpop.f32.mrf.mxu0
        %v913 = vadd.f32 %v677, %v912
        %v914 = vpop.f32.mrf.mxu0
        %v915 = vadd.f32 %v681, %v914
        %916 = vmatprep.mubr.bf16.mxu0 %v633
        %917 = vmatmul.mubr.bf16.gmra.mxu0 %v632
        %v918 = vpop.f32.mrf.mxu0
        %v919 = vadd.f32 %v677, %v918
        %v920 = vpop.f32.mrf.mxu0
        %v921 = vadd.f32 %v681, %v920
        %v922 = vpop.f32.mrf.mxu0
        %v923 = vadd.f32 %v677, %v922
        %v924 = vpop.f32.mrf.mxu0
        %v925 = vadd.f32 %v681, %v924
        %926 = vmatprep.mubr.bf16.mxu0 %v635
        %927 = vmatmul.mubr.bf16.gmra.mxu0 %v634
        %v928 = vpop.f32.mrf.mxu0
        %v929 = vadd.f32 %v677, %v928
        %v930 = vpop.f32.mrf.mxu0
        %v931 = vadd.f32 %v681, %v930
        %v932 = vpop.f32.mrf.mxu0
        %v933 = vadd.f32 %v677, %v932
        %v934 = vpop.f32.mrf.mxu0
        %v935 = vadd.f32 %v681, %v934
        %936 = vmatprep.mubr.bf16.mxu0 %v637
        %937 = vmatmul.mubr.bf16.gmra.mxu0 %v636
        %v938 = vpop.f32.mrf.mxu0
        %v939 = vadd.f32 %v677, %v938
        %v940 = vpop.f32.mrf.mxu0
        %v941 = vadd.f32 %v681, %v940
        %v942 = vpop.f32.mrf.mxu0
        %v943 = vadd.f32 %v677, %v942
        %v944 = vpop.f32.mrf.mxu0
        %v945 = vadd.f32 %v681, %v944
        %946 = vmatprep.mubr.bf16.mxu0 %v639
        %947 = vmatmul.mubr.bf16.gmra.mxu0 %v638
        %v948 = vpop.f32.mrf.mxu0
        %v949 = vadd.f32 %v677, %v948
        %v950 = vpop.f32.mrf.mxu0
        %v951 = vadd.f32 %v681, %v950
        %v952 = vpop.f32.mrf.mxu0
        %v953 = vadd.f32 %v677, %v952
        %v954 = vpop.f32.mrf.mxu0
        %v955 = vadd.f32 %v681, %v954
        %956 = vdwg.mxu0
        %v957 = vmax.f32 %v879, 0.0
        %v958 = vmax.f32 %v881, 0.0
        %v959 = vmax.f32 %v883, 0.0
        %v960 = vmax.f32 %v885, 0.0
        %v961 = vmax.f32 %v889, 0.0
        %v962 = vmax.f32 %v891, 0.0
        %v963 = vmax.f32 %v893, 0.0
        %v964 = vmax.f32 %v895, 0.0
        %v965 = vmax.f32 %v899, 0.0
        %v966 = vmax.f32 %v901, 0.0
        %v967 = vmax.f32 %v903, 0.0
        %v968 = vmax.f32 %v905, 0.0
        %v969 = vmax.f32 %v909, 0.0
        %v970 = vmax.f32 %v911, 0.0
        %v971 = vmax.f32 %v913, 0.0
        %v972 = vmax.f32 %v915, 0.0
        %v973 = vmax.f32 %v919, 0.0
        %v974 = vmax.f32 %v921, 0.0
        %v975 = vmax.f32 %v923, 0.0
        %v976 = vmax.f32 %v925, 0.0
        %v977 = vmax.f32 %v929, 0.0
        %v978 = vmax.f32 %v931, 0.0
        %v979 = vmax.f32 %v933, 0.0
        %v980 = vmax.f32 %v935, 0.0
        %v981 = vmax.f32 %v939, 0.0
        %v982 = vmax.f32 %v941, 0.0
        %v983 = vmax.f32 %v943, 0.0
        %v984 = vmax.f32 %v945, 0.0
        %v985 = vmax.f32 %v949, 0.0
        %v986 = vmax.f32 %v951, 0.0
        %v987 = vmax.f32 %v953, 0.0
        %v988 = vmax.f32 %v955, 0.0
        %v989 = vpack.c.bf16 %v959, %v957
        %v990 = vpack.c.bf16 %v960, %v958
        %v991 = vpack.c.bf16 %v963, %v961
        %v992 = vpack.c.bf16 %v964, %v962
        %v993 = vpack.c.bf16 %v967, %v965
        %v994 = vpack.c.bf16 %v968, %v966
        %v995 = vpack.c.bf16 %v971, %v969
        %v996 = vpack.c.bf16 %v972, %v970
        %v997 = vpack.c.bf16 %v975, %v973
        %v998 = vpack.c.bf16 %v976, %v974
        %v999 = vpack.c.bf16 %v979, %v977
        %v1000 = vpack.c.bf16 %v980, %v978
        %v1001 = vpack.c.bf16 %v983, %v981
        %v1002 = vpack.c.bf16 %v984, %v982
        %v1003 = vpack.c.bf16 %v987, %v985
        %v1004 = vpack.c.bf16 %v988, %v986
        %v1005 = vld [vmem:[#allocation5] sm:$0xff]
        %v1006 = vld [vmem:[#allocation5 + $0x8] sm:$0xff]
        %v1007 = vld [vmem:[#allocation5 + $0x10] sm:$0xff]
        %v1008 = vld [vmem:[#allocation5 + $0x18] sm:$0xff]
        %v1009 = vld [vmem:[#allocation5 + $0x20] sm:$0xff]
        %v1010 = vld [vmem:[#allocation5 + $0x28] sm:$0xff]
        %v1011 = vld [vmem:[#allocation5 + $0x30] sm:$0xff]
        %v1012 = vld [vmem:[#allocation5 + $0x38] sm:$0xff]
        %v1013 = vld [vmem:[#allocation5 + $0x40] sm:$0xff]
        %v1014 = vld [vmem:[#allocation5 + $0x48] sm:$0xff]
        %v1015 = vld [vmem:[#allocation5 + $0x50] sm:$0xff]
        %v1016 = vld [vmem:[#allocation5 + $0x58] sm:$0xff]
        %v1017 = vld [vmem:[#allocation5 + $0x60] sm:$0xff]
        %v1018 = vld [vmem:[#allocation5 + $0x68] sm:$0xff]
        %v1019 = vld [vmem:[#allocation5 + $0x70] sm:$0xff]
        %v1020 = vld [vmem:[#allocation5 + $0x78] sm:$0xff]
        %v1021 = vld [vmem:[#allocation5 + $0x80] sm:$0xff]
        %v1022 = vld [vmem:[#allocation5 + $0x88] sm:$0xff]
        %v1023 = vld [vmem:[#allocation5 + $0x90] sm:$0xff]
        %v1024 = vld [vmem:[#allocation5 + $0x98] sm:$0xff]
        %v1025 = vld [vmem:[#allocation5 + $0xa0] sm:$0xff]
        %v1026 = vld [vmem:[#allocation5 + $0xa8] sm:$0xff]
        %v1027 = vld [vmem:[#allocation5 + $0xb0] sm:$0xff]
        %v1028 = vld [vmem:[#allocation5 + $0xb8] sm:$0xff]
        %v1029 = vld [vmem:[#allocation5 + $0xc0] sm:$0xff]
        %v1030 = vld [vmem:[#allocation5 + $0xc8] sm:$0xff]
        %v1031 = vld [vmem:[#allocation5 + $0xd0] sm:$0xff]
        %v1032 = vld [vmem:[#allocation5 + $0xd8] sm:$0xff]
        %v1033 = vld [vmem:[#allocation5 + $0xe0] sm:$0xff]
        %v1034 = vld [vmem:[#allocation5 + $0xe8] sm:$0xff]
        %v1035 = vld [vmem:[#allocation5 + $0xf0] sm:$0xff]
        %v1036 = vld [vmem:[#allocation5 + $0xf8] sm:$0xff]
        %v1037 = vld [vmem:[%s6] sm:$0x3]
        %v1039 = vlaneseq
        %v1040 = vshrl.u32 %v1039, 7
        %v1041 = vsub.s32 0, %v1040
        %v1042 = vrot.slane %v1037, %v1041
        %v1043 = vlaneseq
        %v1044 = vshrl.u32 %v1043, 7
        %v1045 = vsub.s32 1, %v1044
        %v1046 = vrot.slane %v1037, %v1045
        %v1081 = vunpack.c.l.b16 %v1005
        %v1082 = vunpack.c.h.b16 %v1005
        %v1083 = vunpack.c.l.b16 %v1006
        %v1084 = vunpack.c.h.b16 %v1006
        %v1085 = vunpack.c.l.b16 %v1007
        %v1086 = vunpack.c.h.b16 %v1007
        %v1087 = vunpack.c.l.b16 %v1008
        %v1088 = vunpack.c.h.b16 %v1008
        %v1089 = vunpack.c.l.b16 %v1009
        %v1090 = vunpack.c.h.b16 %v1009
        %v1091 = vunpack.c.l.b16 %v1010
        %v1092 = vunpack.c.h.b16 %v1010
        %v1093 = vunpack.c.l.b16 %v1011
        %v1094 = vunpack.c.h.b16 %v1011
        %v1095 = vunpack.c.l.b16 %v1012
        %v1096 = vunpack.c.h.b16 %v1012
        %v1097 = vunpack.c.l.b16 %v1013
        %v1098 = vunpack.c.h.b16 %v1013
        %v1099 = vunpack.c.l.b16 %v1014
        %v1100 = vunpack.c.h.b16 %v1014
        %v1101 = vunpack.c.l.b16 %v1015
        %v1102 = vunpack.c.h.b16 %v1015
        %v1103 = vunpack.c.l.b16 %v1016
        %v1104 = vunpack.c.h.b16 %v1016
        %v1105 = vunpack.c.l.b16 %v1017
        %v1106 = vunpack.c.h.b16 %v1017
        %v1107 = vunpack.c.l.b16 %v1018
        %v1108 = vunpack.c.h.b16 %v1018
        %v1109 = vunpack.c.l.b16 %v1019
        %v1110 = vunpack.c.h.b16 %v1019
        %v1111 = vunpack.c.l.b16 %v1020
        %v1112 = vunpack.c.h.b16 %v1020
        %v1113 = vunpack.c.l.b16 %v1021
        %v1114 = vunpack.c.h.b16 %v1021
        %v1115 = vunpack.c.l.b16 %v1022
        %v1116 = vunpack.c.h.b16 %v1022
        %v1117 = vunpack.c.l.b16 %v1023
        %v1118 = vunpack.c.h.b16 %v1023
        %v1119 = vunpack.c.l.b16 %v1024
        %v1120 = vunpack.c.h.b16 %v1024
        %v1121 = vunpack.c.l.b16 %v1025
        %v1122 = vunpack.c.h.b16 %v1025
        %v1123 = vunpack.c.l.b16 %v1026
        %v1124 = vunpack.c.h.b16 %v1026
        %v1125 = vunpack.c.l.b16 %v1027
        %v1126 = vunpack.c.h.b16 %v1027
        %v1127 = vunpack.c.l.b16 %v1028
        %v1128 = vunpack.c.h.b16 %v1028
        %v1129 = vunpack.c.l.b16 %v1029
        %v1130 = vunpack.c.h.b16 %v1029
        %v1131 = vunpack.c.l.b16 %v1030
        %v1132 = vunpack.c.h.b16 %v1030
        %v1133 = vunpack.c.l.b16 %v1031
        %v1134 = vunpack.c.h.b16 %v1031
        %v1135 = vunpack.c.l.b16 %v1032
        %v1136 = vunpack.c.h.b16 %v1032
        %v1137 = vunpack.c.l.b16 %v1033
        %v1138 = vunpack.c.h.b16 %v1033
        %v1139 = vunpack.c.l.b16 %v1034
        %v1140 = vunpack.c.h.b16 %v1034
        %v1141 = vunpack.c.l.b16 %v1035
        %v1142 = vunpack.c.h.b16 %v1035
        %v1143 = vunpack.c.l.b16 %v1036
        %v1144 = vunpack.c.h.b16 %v1036
        %v1145 = vpack.c.b16 %v1083, %v1081
        %v1146 = vpack.c.b16 %v1084, %v1082
        %v1147 = vpack.c.b16 %v1087, %v1085
        %v1148 = vpack.c.b16 %v1088, %v1086
        %v1149 = vpack.c.b16 %v1091, %v1089
        %v1150 = vpack.c.b16 %v1092, %v1090
        %v1151 = vpack.c.b16 %v1095, %v1093
        %v1152 = vpack.c.b16 %v1096, %v1094
        %v1153 = vpack.c.b16 %v1099, %v1097
        %v1154 = vpack.c.b16 %v1100, %v1098
        %v1155 = vpack.c.b16 %v1103, %v1101
        %v1156 = vpack.c.b16 %v1104, %v1102
        %v1157 = vpack.c.b16 %v1107, %v1105
        %v1158 = vpack.c.b16 %v1108, %v1106
        %v1159 = vpack.c.b16 %v1111, %v1109
        %v1160 = vpack.c.b16 %v1112, %v1110
        %v1161 = vpack.c.b16 %v1115, %v1113
        %v1162 = vpack.c.b16 %v1116, %v1114
        %v1163 = vpack.c.b16 %v1119, %v1117
        %v1164 = vpack.c.b16 %v1120, %v1118
        %v1165 = vpack.c.b16 %v1123, %v1121
        %v1166 = vpack.c.b16 %v1124, %v1122
        %v1167 = vpack.c.b16 %v1127, %v1125
        %v1168 = vpack.c.b16 %v1128, %v1126
        %v1169 = vpack.c.b16 %v1131, %v1129
        %v1170 = vpack.c.b16 %v1132, %v1130
        %v1171 = vpack.c.b16 %v1135, %v1133
        %v1172 = vpack.c.b16 %v1136, %v1134
        %v1173 = vpack.c.b16 %v1139, %v1137
        %v1174 = vpack.c.b16 %v1140, %v1138
        %v1175 = vpack.c.b16 %v1143, %v1141
        %v1176 = vpack.c.b16 %v1144, %v1142
        %1209 = vmatprep.subr.bf16.mxu0 %v1160
        %1210 = vmatpush1.bf16.msra.mxu0 %v1159
        %1211 = vmatprep.subr.bf16.mxu0 %v1158
        %1212 = vmatpush1.bf16.msra.mxu0 %v1157
        %1213 = vmatprep.subr.bf16.mxu0 %v1156
        %1214 = vmatpush1.bf16.msra.mxu0 %v1155
        %1215 = vmatprep.subr.bf16.mxu0 %v1154
        %1216 = vmatpush1.bf16.msra.mxu0 %v1153
        %1217 = vmatprep.subr.bf16.mxu0 %v1152
        %1218 = vmatpush1.bf16.msra.mxu0 %v1151
        %1219 = vmatprep.subr.bf16.mxu0 %v1150
        %1220 = vmatpush1.bf16.msra.mxu0 %v1149
        %1221 = vmatprep.subr.bf16.mxu0 %v1148
        %1222 = vmatpush1.bf16.msra.mxu0 %v1147
        %1223 = vmatprep.subr.bf16.mxu0 %v1146
        %1224 = vmatpush1.bf16.msra.mxu0 %v1145
        %1225 = vmatprep.subr.bf16.mxu0 %v1176
        %1226 = vmatpush2.bf16.msra.mxu0 %v1175
        %1227 = vmatprep.subr.bf16.mxu0 %v1174
        %1228 = vmatpush2.bf16.msra.mxu0 %v1173
        %1229 = vmatprep.subr.bf16.mxu0 %v1172
        %1230 = vmatpush2.bf16.msra.mxu0 %v1171
        %1231 = vmatprep.subr.bf16.mxu0 %v1170
        %1232 = vmatpush2.bf16.msra.mxu0 %v1169
        %1233 = vmatprep.subr.bf16.mxu0 %v1168
        %1234 = vmatpush2.bf16.msra.mxu0 %v1167
        %1235 = vmatprep.subr.bf16.mxu0 %v1166
        %1236 = vmatpush2.bf16.msra.mxu0 %v1165
        %1237 = vmatprep.subr.bf16.mxu0 %v1164
        %1238 = vmatpush2.bf16.msra.mxu0 %v1163
        %1239 = vmatprep.subr.bf16.mxu0 %v1162
        %1240 = vmatpush2.bf16.msra.mxu0 %v1161
        %1241 = vmatprep.mubr.bf16.mxu0 %v990
        %1242 = vmatmul.mubr.bf16.gmra.mxu0 %v989
        %v1243 = vpop.f32.mrf.mxu0
        %v1244 = vadd.f32 %v1042, %v1243
        %v1245 = vpop.f32.mrf.mxu0
        %v1246 = vadd.f32 %v1046, %v1245
        %v1247 = vpop.f32.mrf.mxu0
        %v1248 = vadd.f32 %v1042, %v1247
        %v1249 = vpop.f32.mrf.mxu0
        %v1250 = vadd.f32 %v1046, %v1249
        %1251 = vmatprep.mubr.bf16.mxu0 %v992
        %1252 = vmatmul.mubr.bf16.gmra.mxu0 %v991
        %v1253 = vpop.f32.mrf.mxu0
        %v1254 = vadd.f32 %v1042, %v1253
        %v1255 = vpop.f32.mrf.mxu0
        %v1256 = vadd.f32 %v1046, %v1255
        %v1257 = vpop.f32.mrf.mxu0
        %v1258 = vadd.f32 %v1042, %v1257
        %v1259 = vpop.f32.mrf.mxu0
        %v1260 = vadd.f32 %v1046, %v1259
        %1261 = vmatprep.mubr.bf16.mxu0 %v994
        %1262 = vmatmul.mubr.bf16.gmra.mxu0 %v993
        %v1263 = vpop.f32.mrf.mxu0
        %v1264 = vadd.f32 %v1042, %v1263
        %v1265 = vpop.f32.mrf.mxu0
        %v1266 = vadd.f32 %v1046, %v1265
        %v1267 = vpop.f32.mrf.mxu0
        %v1268 = vadd.f32 %v1042, %v1267
        %v1269 = vpop.f32.mrf.mxu0
        %v1270 = vadd.f32 %v1046, %v1269
        %1271 = vmatprep.mubr.bf16.mxu0 %v996
        %1272 = vmatmul.mubr.bf16.gmra.mxu0 %v995
        %v1273 = vpop.f32.mrf.mxu0
        %v1274 = vadd.f32 %v1042, %v1273
        %v1275 = vpop.f32.mrf.mxu0
        %v1276 = vadd.f32 %v1046, %v1275
        %v1277 = vpop.f32.mrf.mxu0
        %v1278 = vadd.f32 %v1042, %v1277
        %v1279 = vpop.f32.mrf.mxu0
        %v1280 = vadd.f32 %v1046, %v1279
        %1281 = vmatprep.mubr.bf16.mxu0 %v998
        %1282 = vmatmul.mubr.bf16.gmra.mxu0 %v997
        %v1283 = vpop.f32.mrf.mxu0
        %v1284 = vadd.f32 %v1042, %v1283
        %v1285 = vpop.f32.mrf.mxu0
        %v1286 = vadd.f32 %v1046, %v1285
        %v1287 = vpop.f32.mrf.mxu0
        %v1288 = vadd.f32 %v1042, %v1287
        %v1289 = vpop.f32.mrf.mxu0
        %v1290 = vadd.f32 %v1046, %v1289
        %1291 = vmatprep.mubr.bf16.mxu0 %v1000
        %1292 = vmatmul.mubr.bf16.gmra.mxu0 %v999
        %v1293 = vpop.f32.mrf.mxu0
        %v1294 = vadd.f32 %v1042, %v1293
        %v1295 = vpop.f32.mrf.mxu0
        %v1296 = vadd.f32 %v1046, %v1295
        %v1297 = vpop.f32.mrf.mxu0
        %v1298 = vadd.f32 %v1042, %v1297
        %v1299 = vpop.f32.mrf.mxu0
        %v1300 = vadd.f32 %v1046, %v1299
        %1301 = vmatprep.mubr.bf16.mxu0 %v1002
        %1302 = vmatmul.mubr.bf16.gmra.mxu0 %v1001
        %v1303 = vpop.f32.mrf.mxu0
        %v1304 = vadd.f32 %v1042, %v1303
        %v1305 = vpop.f32.mrf.mxu0
        %v1306 = vadd.f32 %v1046, %v1305
        %v1307 = vpop.f32.mrf.mxu0
        %v1308 = vadd.f32 %v1042, %v1307
        %v1309 = vpop.f32.mrf.mxu0
        %v1310 = vadd.f32 %v1046, %v1309
        %1311 = vmatprep.mubr.bf16.mxu0 %v1004
        %1312 = vmatmul.mubr.bf16.gmra.mxu0 %v1003
        %v1313 = vpop.f32.mrf.mxu0
        %v1314 = vadd.f32 %v1042, %v1313
        %v1315 = vpop.f32.mrf.mxu0
        %v1316 = vadd.f32 %v1046, %v1315
        %v1317 = vpop.f32.mrf.mxu0
        %v1318 = vadd.f32 %v1042, %v1317
        %v1319 = vpop.f32.mrf.mxu0
        %v1320 = vadd.f32 %v1046, %v1319
        %1321 = vdwg.mxu0
        %v1322 = vmax.f32 %v1244, 0.0
        %v1323 = vmax.f32 %v1246, 0.0
        %v1324 = vmax.f32 %v1248, 0.0
        %v1325 = vmax.f32 %v1250, 0.0
        %v1326 = vmax.f32 %v1254, 0.0
        %v1327 = vmax.f32 %v1256, 0.0
        %v1328 = vmax.f32 %v1258, 0.0
        %v1329 = vmax.f32 %v1260, 0.0
        %v1330 = vmax.f32 %v1264, 0.0
        %v1331 = vmax.f32 %v1266, 0.0
        %v1332 = vmax.f32 %v1268, 0.0
        %v1333 = vmax.f32 %v1270, 0.0
        %v1334 = vmax.f32 %v1274, 0.0
        %v1335 = vmax.f32 %v1276, 0.0
        %v1336 = vmax.f32 %v1278, 0.0
        %v1337 = vmax.f32 %v1280, 0.0
        %v1338 = vmax.f32 %v1284, 0.0
        %v1339 = vmax.f32 %v1286, 0.0
        %v1340 = vmax.f32 %v1288, 0.0
        %v1341 = vmax.f32 %v1290, 0.0
        %v1342 = vmax.f32 %v1294, 0.0
        %v1343 = vmax.f32 %v1296, 0.0
        %v1344 = vmax.f32 %v1298, 0.0
        %v1345 = vmax.f32 %v1300, 0.0
        %v1346 = vmax.f32 %v1304, 0.0
        %v1347 = vmax.f32 %v1306, 0.0
        %v1348 = vmax.f32 %v1308, 0.0
        %v1349 = vmax.f32 %v1310, 0.0
        %v1350 = vmax.f32 %v1314, 0.0
        %v1351 = vmax.f32 %v1316, 0.0
        %v1352 = vmax.f32 %v1318, 0.0
        %v1353 = vmax.f32 %v1320, 0.0
        %v1354 = vld [vmem:[%s7] sm:$0x3]
        %v1356 = vlaneseq
        %v1357 = vshrl.u32 %v1356, 7
        %v1358 = vsub.s32 0, %v1357
        %v1359 = vrot.slane %v1354, %v1358
        %v1360 = vlaneseq
        %v1361 = vshrl.u32 %v1360, 7
        %v1362 = vsub.s32 1, %v1361
        %v1363 = vrot.slane %v1354, %v1362
        %v1366 = vmul.f32 %v1322, %v1359
        %v1367 = vmul.f32 %v1323, %v1363
        %v1368 = vmul.f32 %v1324, %v1359
        %v1369 = vmul.f32 %v1325, %v1363
        %v1370 = vmul.f32 %v1326, %v1359
        %v1371 = vmul.f32 %v1327, %v1363
        %v1372 = vmul.f32 %v1328, %v1359
        %v1373 = vmul.f32 %v1329, %v1363
        %v1374 = vmul.f32 %v1330, %v1359
        %v1375 = vmul.f32 %v1331, %v1363
        %v1376 = vmul.f32 %v1332, %v1359
        %v1377 = vmul.f32 %v1333, %v1363
        %v1378 = vmul.f32 %v1334, %v1359
        %v1379 = vmul.f32 %v1335, %v1363
        %v1380 = vmul.f32 %v1336, %v1359
        %v1381 = vmul.f32 %v1337, %v1363
        %v1382 = vmul.f32 %v1338, %v1359
        %v1383 = vmul.f32 %v1339, %v1363
        %v1384 = vmul.f32 %v1340, %v1359
        %v1385 = vmul.f32 %v1341, %v1363
        %v1386 = vmul.f32 %v1342, %v1359
        %v1387 = vmul.f32 %v1343, %v1363
        %v1388 = vmul.f32 %v1344, %v1359
        %v1389 = vmul.f32 %v1345, %v1363
        %v1390 = vmul.f32 %v1346, %v1359
        %v1391 = vmul.f32 %v1347, %v1363
        %v1392 = vmul.f32 %v1348, %v1359
        %v1393 = vmul.f32 %v1349, %v1363
        %v1394 = vmul.f32 %v1350, %v1359
        %v1395 = vmul.f32 %v1351, %v1363
        %v1396 = vmul.f32 %v1352, %v1359
        %v1397 = vmul.f32 %v1353, %v1363
        %v1398 = vadd.f32 %v1366, %v1367
        %1399 = vadd.xlane.f32.xlu0 %v1398
        %v1400 = vpop.xlane.xlu0 %1399
        %v1401 = vadd.f32 %v1368, %v1369
        %1402 = vadd.xlane.f32.xlu0 %v1401
        %v1403 = vpop.xlane.xlu0 %1402
        %v1404 = vadd.f32 %v1370, %v1371
        %1405 = vadd.xlane.f32.xlu0 %v1404
        %v1406 = vpop.xlane.xlu0 %1405
        %v1407 = vadd.f32 %v1372, %v1373
        %1408 = vadd.xlane.f32.xlu0 %v1407
        %v1409 = vpop.xlane.xlu0 %1408
        %v1410 = vadd.f32 %v1374, %v1375
        %1411 = vadd.xlane.f32.xlu0 %v1410
        %v1412 = vpop.xlane.xlu0 %1411
        %v1413 = vadd.f32 %v1376, %v1377
        %1414 = vadd.xlane.f32.xlu0 %v1413
        %v1415 = vpop.xlane.xlu0 %1414
        %v1416 = vadd.f32 %v1378, %v1379
        %1417 = vadd.xlane.f32.xlu0 %v1416
        %v1418 = vpop.xlane.xlu0 %1417
        %v1419 = vadd.f32 %v1380, %v1381
        %1420 = vadd.xlane.f32.xlu0 %v1419
        %v1421 = vpop.xlane.xlu0 %1420
        %v1422 = vadd.f32 %v1382, %v1383
        %1423 = vadd.xlane.f32.xlu0 %v1422
        %v1424 = vpop.xlane.xlu0 %1423
        %v1425 = vadd.f32 %v1384, %v1385
        %1426 = vadd.xlane.f32.xlu0 %v1425
        %v1427 = vpop.xlane.xlu0 %1426
        %v1428 = vadd.f32 %v1386, %v1387
        %1429 = vadd.xlane.f32.xlu0 %v1428
        %v1430 = vpop.xlane.xlu0 %1429
        %v1431 = vadd.f32 %v1388, %v1389
        %1432 = vadd.xlane.f32.xlu0 %v1431
        %v1433 = vpop.xlane.xlu0 %1432
        %v1434 = vadd.f32 %v1390, %v1391
        %1435 = vadd.xlane.f32.xlu0 %v1434
        %v1436 = vpop.xlane.xlu0 %1435
        %v1437 = vadd.f32 %v1392, %v1393
        %1438 = vadd.xlane.f32.xlu0 %v1437
        %v1439 = vpop.xlane.xlu0 %1438
        %v1440 = vadd.f32 %v1394, %v1395
        %1441 = vadd.xlane.f32.xlu0 %v1440
        %v1442 = vpop.xlane.xlu0 %1441
        %v1443 = vadd.f32 %v1396, %v1397
        %1444 = vadd.xlane.f32.xlu0 %v1443
        %v1445 = vpop.xlane.xlu0 %1444
        %v1446 = vld [vmem:[#allocation2] sm:$0x1]
        %v1448 = vlaneseq
        %v1449 = vshrl.u32 %v1448, 7
        %v1450 = vsub.s32 0, %v1449
        %v1451 = vrot.slane %v1446, %v1450
        %v1453 = vadd.f32 %v1400, %v1451
        %v1454 = vadd.f32 %v1403, %v1451
        %v1455 = vadd.f32 %v1406, %v1451
        %v1456 = vadd.f32 %v1409, %v1451
        %v1457 = vadd.f32 %v1412, %v1451
        %v1458 = vadd.f32 %v1415, %v1451
        %v1459 = vadd.f32 %v1418, %v1451
        %v1460 = vadd.f32 %v1421, %v1451
        %v1461 = vadd.f32 %v1424, %v1451
        %v1462 = vadd.f32 %v1427, %v1451
        %v1463 = vadd.f32 %v1430, %v1451
        %v1464 = vadd.f32 %v1433, %v1451
        %v1465 = vadd.f32 %v1436, %v1451
        %v1466 = vadd.f32 %v1439, %v1451
        %v1467 = vadd.f32 %v1442, %v1451
        %v1468 = vadd.f32 %v1445, %v1451
        %vm1469 = vcmask 7168
        %1470 = vst.msk [vmem:[%s366] sm:$0xff] %vm1469, %v1453
        %1471 = vst.msk [vmem:[%s366 + $0x8] sm:$0xff] %vm1469, %v1454
        %1472 = vst.msk [vmem:[%s366 + $0x10] sm:$0xff] %vm1469, %v1455
        %1473 = vst.msk [vmem:[%s366 + $0x18] sm:$0xff] %vm1469, %v1456
        %1474 = vst.msk [vmem:[%s366 + $0x20] sm:$0xff] %vm1469, %v1457
        %1475 = vst.msk [vmem:[%s366 + $0x28] sm:$0xff] %vm1469, %v1458
        %1476 = vst.msk [vmem:[%s366 + $0x30] sm:$0xff] %vm1469, %v1459
        %1477 = vst.msk [vmem:[%s366 + $0x38] sm:$0xff] %vm1469, %v1460
        %1478 = vst.msk [vmem:[%s366 + $0x40] sm:$0xff] %vm1469, %v1461
        %1479 = vst.msk [vmem:[%s366 + $0x48] sm:$0xff] %vm1469, %v1462
        %1480 = vst.msk [vmem:[%s366 + $0x50] sm:$0xff] %vm1469, %v1463
        %1481 = vst.msk [vmem:[%s366 + $0x58] sm:$0xff] %vm1469, %v1464
        %1482 = vst.msk [vmem:[%s366 + $0x60] sm:$0xff] %vm1469, %v1465
        %1483 = vst.msk [vmem:[%s366 + $0x68] sm:$0xff] %vm1469, %v1466
        %1484 = vst.msk [vmem:[%s366 + $0x70] sm:$0xff] %vm1469, %v1467
        %1485 = vst.msk [vmem:[%s366 + $0x78] sm:$0xff] %vm1469, %v1468
        %s1486 = smul.u32 16, %s24
        %p1487 = scmp.lt.s32.totalorder %s1486, 31
        %s1488 = scalar_select %p1487, %s1486, 31
        %s1489 = smul.addr %s1488, 8
        %s1490 = scalar_lea.vmem %s9, %s1489
        // Predicated region
        $region65: #{residual_critic_forward.1} parent=55 // pred_check
          %p1491 = pneg %p236
        $region66: #{residual_critic_forward.1} parent=55 // pred_check_branch
          %1493 = sbr.rel (%p1491) target = $region68
        $region67: #{residual_critic_forward.1} parent=55 // pred_region
          %s1494 = smul.u32 16, %s24
        $region68: #{residual_critic_forward.1} parent=55 // pred_fallthru
          _
      $region56: #{residual_critic_forward.1} parent=5 // pred_fallthru
        _
      %p1495 = scmp.le.s32.totalorder 2, %s19
      // Predicated region
      $region69: #{residual_critic_forward.1} parent=5 // pred_check
        %p1496 = pneg %p1495
      $region70: #{residual_critic_forward.1} parent=5 // pred_check_branch
        %1498 = sbr.rel (%p1496) target = $region72
      $region71: #{residual_critic_forward.1} parent=5 // pred_region
        %s1499 = ssub.s32 %s19, 2
        // Predicated region
        $region73: #{residual_critic_forward.1} parent=71 // pred_check
          %p1500 = pneg %p242
        $region74: #{residual_critic_forward.1} parent=71 // pred_check_branch
          %1502 = sbr.rel (%p1500) target = $region76
        $region75: #{residual_critic_forward.1} parent=71 // pred_region
          %s1503 = smul.u32 16, %s25
          %p1504 = scmp.lt.s32.totalorder %s1503, 31
          %s1505 = scalar_select %p1504, %s1503, 31
          %s1506 = smul.addr %s1505, 8
          %s1507 = scalar_lea.vmem %s9, %s1506
        $region76: #{residual_critic_forward.1} parent=71 // pred_fallthru
          _
      $region72: #{residual_critic_forward.1} parent=5 // pred_fallthru
        _
    $region6: #{residual_critic_forward.1} parent=1 // loop_footer
      %s23 = sadd.s32 1, %s19
    $region7: #{residual_critic_forward.1} parent=1 // loop_footer_branch
      %18 = sbr.rel target = $region3
    $region8: #{residual_critic_forward.1} parent=1 // loop_exit
      _
    %1508 = vsyncpa [#allocation4], 1
    %s1509 = scalar_lea.sflag [#allocation4], 1
    %1510 = vsyncpa %s1509, 1
    %1511 = vsyncpa [#allocation6], 1

</llo_original>
